<compile_context>
chip_gen: v5e
topology: v5e:2x2
jax: 0.10.0
libtpu: 0.0.40
codegen_flags: <defaults>
</compile_context>

<pallas_src>
import math
import jax
import jax.numpy as jnp
from jax.experimental import pallas as pl
from jax.experimental.pallas import tpu as pltpu

# -------------------- config (matches ModelConfig) --------------------
NUM_FILTERS = 40              # frequency bins / LSTM input size
ENC_DIM = 64                  # LSTM hidden size
N_CLASSES = 251
C_PAD = 256                   # classifier columns padded to a lane-dense multiple of 128
WIN = 400                     # window_length
HOP = 400                     # hop_length
N_FFT = NUM_FILTERS * 2 - 1   # 79


# -------------------- fused kernel --------------------
def fused_model_kernel(frames_ref, basis_ref, w_ih_ref, w_hh_ref, b_ref,
                       w_out_ref, b_out_ref, out_ref):
    # frames_ref: [b_tile*T, WIN]   (row = b*T + t, batch-major)
    # basis_ref : [WIN, 2F]         (fused [cos | -sin] windowed-DFT basis)
    # w_ih_ref  : [F, 4H]  w_hh_ref: [H, 4H]  b_ref: [1, 4H] (b_ih + b_hh)
    # w_out_ref : [H, C_PAD]        b_out_ref: [1, C_PAD]
    # out_ref   : [b_tile, C_PAD]
    bt = out_ref.shape[0]
    BT = frames_ref.shape[0]
    T = BT // bt
    F = w_ih_ref.shape[0]
    H = w_hh_ref.shape[0]

    # ---- STFT power + log10: one fused matmul over every frame of the tile ----
    y = jnp.dot(frames_ref[...], basis_ref[...],
                preferred_element_type=jnp.float32)          # [BT, 2F]
    re = y[:, :F]
    im = y[:, F:]
    log_pow = jnp.log10(re * re + im * im + 1e-9)            # [BT, F]  (fp32)

    # ---- hoisted LSTM input projection (+ combined bias), off the serial path ----
    xp = (jnp.dot(log_pow, w_ih_ref[...], preferred_element_type=jnp.float32)
          + b_ref[...])                                      # [BT, 4H]
    # Sublane-tile-aligned reshape (T is a multiple of 8 only for large T; for this size
    # it is a no-op split of the leading dim, trailing lane dim unchanged -> cheap).
    xp = xp.reshape(bt, T, 4 * H)                            # [b_tile, T, 4H]

    w_hh = w_hh_ref[...]
    h = jnp.zeros((bt, H), jnp.float32)
    c = jnp.zeros((bt, H), jnp.float32)
    acc = jnp.zeros((bt, H), jnp.float32)

    # Serial recurrence over time; T is small and static -> fully unrolled straight-line
    # code with static slices. Gate order (i, f, g, o) matches PyTorch.
    # TODO(synk): for long sequences switch to lax.fori_loop with a small unroll factor.
    for t in range(T):
        gates = xp[:, t, :] + jnp.dot(h, w_hh,
                                      preferred_element_type=jnp.float32)  # [bt, 4H]
        i_g = jax.nn.sigmoid(gates[:, 0 * H:1 * H])
        f_g = jax.nn.sigmoid(gates[:, 1 * H:2 * H])
        g_g = jnp.tanh(gates[:, 2 * H:3 * H])
        o_g = jax.nn.sigmoid(gates[:, 3 * H:4 * H])
        c = f_g * c + i_g * g_g
        h = o_g * jnp.tanh(c)
        acc = acc + h

    # ---- temporal mean + (lane-padded) classifier ----
    mean_h = acc * (1.0 / T)                                  # scale the small [bt, H] tile
    out_ref[...] = (jnp.dot(mean_h, w_out_ref[...],
                            preferred_element_type=jnp.float32)
                    + b_out_ref[...])


# -------------------- wrapper --------------------
def model_forward(params, x, *, b_tile=None):
    # x: [B, L] waveform
    B, L = x.shape
    T = (L - WIN) // HOP + 1
    # hop == win, so framing is a pure (free) reshape; rows are batch-major (b*T + t).
    frames = x[:, :T * WIN].reshape(B * T, WIN)

    if b_tile is None:
        b_tile = B                      # single grid step: best on 1-TC chips (v5e/v6e)
    assert B % b_tile == 0
    assert b_tile == B or b_tile % 8 == 0, "partial batch tiles must be sublane-aligned"
    grid = (B // b_tile,)               # marked "parallel": shards across v7x TensorCores

    logits_padded = pl.pallas_call(
        fused_model_kernel,
        out_shape=jax.ShapeDtypeStruct((B, C_PAD), jnp.float32),
        grid=grid,
        in_specs=[
            pl.BlockSpec((b_tile * T, WIN), lambda i: (i, 0)),
            pl.BlockSpec((WIN, 2 * NUM_FILTERS), lambda i: (0, 0)),
            pl.BlockSpec((NUM_FILTERS, 4 * ENC_DIM), lambda i: (0, 0)),
            pl.BlockSpec((ENC_DIM, 4 * ENC_DIM), lambda i: (0, 0)),
            pl.BlockSpec((1, 4 * ENC_DIM), lambda i: (0, 0)),
            pl.BlockSpec((ENC_DIM, C_PAD), lambda i: (0, 0)),
            pl.BlockSpec((1, C_PAD), lambda i: (0, 0)),
        ],
        out_specs=pl.BlockSpec((b_tile, C_PAD), lambda i: (i, 0)),
        compiler_params=pltpu.CompilerParams(
            dimension_semantics=("parallel",)),
    )(frames, params["basis"], params["w_ih"], params["w_hh"], params["b"],
      params["w_out"], params["b_out"])

    return logits_padded[:, :N_CLASSES]          # drop the lane padding


# -------------------- parameter construction (deterministic) --------------------
def make_params(key):
    k1, k2, k3, k4, k5, k6 = jax.random.split(key, 6)
    bound = 1.0 / math.sqrt(ENC_DIM)

    # LSTM weights, gate order (i, f, g, o); stored transposed so x @ W works.
    w_ih = jax.random.uniform(k1, (NUM_FILTERS, 4 * ENC_DIM), jnp.float32, -bound, bound)
    w_hh = jax.random.uniform(k2, (ENC_DIM, 4 * ENC_DIM), jnp.float32, -bound, bound)
    b_ih = jax.random.uniform(k3, (1, 4 * ENC_DIM), jnp.float32, -bound, bound)
    b_hh = jax.random.uniform(k4, (1, 4 * ENC_DIM), jnp.float32, -bound, bound)
    b = b_ih + b_hh

    # Linear(ENC_DIM, N_CLASSES), lane-padded to C_PAD with zeros (sliced off after the kernel).
    w_out_core = jax.random.uniform(k5, (ENC_DIM, N_CLASSES), jnp.float32, -bound, bound)
    b_out_core = jax.random.uniform(k6, (1, N_CLASSES), jnp.float32, -bound, bound)
    w_out = jnp.zeros((ENC_DIM, C_PAD), jnp.float32).at[:, :N_CLASSES].set(w_out_core)
    b_out = jnp.zeros((1, C_PAD), jnp.float32).at[:, :N_CLASSES].set(b_out_core)

    # Fused windowed-DFT basis (periodic Hann): [WIN, 2F] = [window*cos | -window*sin].
    n = jnp.arange(WIN, dtype=jnp.float32)
    window = 0.5 * (1.0 - jnp.cos(2.0 * jnp.pi * n / WIN))
    k = jnp.arange(NUM_FILTERS, dtype=jnp.float32)
    ang = 2.0 * jnp.pi * n[:, None] * k[None, :] / N_FFT        # [WIN, F]
    cos_b = window[:, None] * jnp.cos(ang)
    sin_b = -window[:, None] * jnp.sin(ang)
    basis = jnp.concatenate([cos_b, sin_b], axis=1).astype(jnp.float32)

    return dict(w_ih=w_ih, w_hh=w_hh, b=b, w_out=w_out, b_out=b_out, basis=basis)


if __name__ == "__main__":
    key = jax.random.PRNGKey(0)
    pkey, xkey = jax.random.split(key)
    params = make_params(pkey)

    B = 2
    T = 8
    L = T * HOP                                   # 3200 samples -> 8 frames
    x = jax.random.normal(xkey, (B, L), dtype=jnp.float32)

    out = jax.jit(model_forward)(params, x)
    out = jax.block_until_ready(out)
    assert out.shape == (B, N_CLASSES), out.shape
    assert bool(jnp.all(jnp.isfinite(out))), "non-finite logits"
    print("KERNEL_OK")
</pallas_src>

<mosaic_0001>
module attributes {stable_mosaic.version = 11 : i64} {
  func.func @fused_model_kernel(%arg0: i32, %arg1: memref<16x400xf32, #tpu.memory_space<vmem>>, %arg2: memref<400x80xf32, #tpu.memory_space<vmem>>, %arg3: memref<40x256xf32, #tpu.memory_space<vmem>>, %arg4: memref<64x256xf32, #tpu.memory_space<vmem>>, %arg5: memref<1x256xf32, #tpu.memory_space<vmem>>, %arg6: memref<64x256xf32, #tpu.memory_space<vmem>>, %arg7: memref<1x256xf32, #tpu.memory_space<vmem>>, %arg8: memref<2x256xf32, #tpu.memory_space<vmem>>) attributes {dimension_semantics = [#tpu.dimension_semantics<parallel>], iteration_bounds = array<i64: 1>, scalar_prefetch = 0 : i64, scratch_operands = 0 : i64, tpu.core_type = #tpu.core_type<tc>, window_params = [{transform_indices = @transform_0, window_bounds = array<i64: 16, 400>}, {pipeline_mode = #tpu.pipeline_mode<synchronous>, transform_indices = @transform_1, window_bounds = array<i64: 400, 80>}, {pipeline_mode = #tpu.pipeline_mode<synchronous>, transform_indices = @transform_2, window_bounds = array<i64: 40, 256>}, {pipeline_mode = #tpu.pipeline_mode<synchronous>, transform_indices = @transform_3, window_bounds = array<i64: 64, 256>}, {pipeline_mode = #tpu.pipeline_mode<synchronous>, transform_indices = @transform_4, window_bounds = array<i64: 1, 256>}, {pipeline_mode = #tpu.pipeline_mode<synchronous>, transform_indices = @transform_5, window_bounds = array<i64: 64, 256>}, {pipeline_mode = #tpu.pipeline_mode<synchronous>, transform_indices = @transform_6, window_bounds = array<i64: 1, 256>}, {transform_indices = @transform_7, window_bounds = array<i64: 2, 256>}]} {
    %c0 = arith.constant 0 : index
    %c0_0 = arith.constant 0 : index
    %0 = vector.load %arg1[%c0, %c0_0] : memref<16x400xf32, #tpu.memory_space<vmem>>, vector<16x400xf32>
    %c0_1 = arith.constant 0 : index
    %c0_2 = arith.constant 0 : index
    %1 = vector.load %arg2[%c0_1, %c0_2] : memref<400x80xf32, #tpu.memory_space<vmem>>, vector<400x80xf32>
    %cst = arith.constant dense<0.000000e+00> : vector<16x80xf32>
    %2 = tpu.matmul %0, %1, %cst {dimension_numbers = #tpu.dot_dimension_numbers<[1], [0], [0], [1], [0, 0, 1, 1], [], []>} : vector<16x400xf32>, vector<400x80xf32>, vector<16x80xf32> -> vector<16x80xf32>
    %3 = vector.extract_strided_slice %2 {offsets = [0, 0], sizes = [16, 40], strides = [1, 1]} : vector<16x80xf32> to vector<16x40xf32>
    %4 = vector.extract_strided_slice %2 {offsets = [0, 40], sizes = [16, 40], strides = [1, 1]} : vector<16x80xf32> to vector<16x40xf32>
    %5 = arith.mulf %3, %3 : vector<16x40xf32>
    %6 = arith.mulf %4, %4 : vector<16x40xf32>
    %7 = arith.addf %5, %6 : vector<16x40xf32>
    %cst_3 = arith.constant 9.99999971E-10 : f32
    %8 = vector.broadcast %cst_3 : f32 to vector<16x40xf32>
    %9 = arith.addf %7, %8 : vector<16x40xf32>
    %10 = math.log %9 : vector<16x40xf32>
    %cst_4 = arith.constant 0.434294492 : f32
    %11 = vector.broadcast %cst_4 : f32 to vector<16x40xf32>
    %12 = arith.mulf %10, %11 : vector<16x40xf32>
    %c0_5 = arith.constant 0 : index
    %c0_6 = arith.constant 0 : index
    %13 = vector.load %arg3[%c0_5, %c0_6] : memref<40x256xf32, #tpu.memory_space<vmem>>, vector<40x256xf32>
    %cst_7 = arith.constant dense<0.000000e+00> : vector<16x256xf32>
    %14 = tpu.matmul %12, %13, %cst_7 {dimension_numbers = #tpu.dot_dimension_numbers<[1], [0], [0], [1], [0, 0, 1, 1], [], []>} : vector<16x40xf32>, vector<40x256xf32>, vector<16x256xf32> -> vector<16x256xf32>
    %c0_8 = arith.constant 0 : index
    %c0_9 = arith.constant 0 : index
    %15 = vector.load %arg5[%c0_8, %c0_9] : memref<1x256xf32, #tpu.memory_space<vmem>>, vector<1x256xf32>
    %16 = vector.broadcast %15 : vector<1x256xf32> to vector<16x256xf32>
    %17 = arith.addf %14, %16 : vector<16x256xf32>
    %18 = vector.shape_cast %17 : vector<16x256xf32> to vector<2x8x256xf32>
    %c0_10 = arith.constant 0 : index
    %c0_11 = arith.constant 0 : index
    %19 = vector.load %arg4[%c0_10, %c0_11] : memref<64x256xf32, #tpu.memory_space<vmem>>, vector<64x256xf32>
    %cst_12 = arith.constant 0.000000e+00 : f32
    %20 = vector.broadcast %cst_12 : f32 to vector<2x64xf32>
    %cst_13 = arith.constant 0.000000e+00 : f32
    %21 = vector.broadcast %cst_13 : f32 to vector<2x64xf32>
    %cst_14 = arith.constant 0.000000e+00 : f32
    %22 = vector.broadcast %cst_14 : f32 to vector<2x64xf32>
    %23 = vector.extract_strided_slice %18 {offsets = [0, 0, 0], sizes = [2, 1, 256], strides = [1, 1, 1]} : vector<2x8x256xf32> to vector<2x1x256xf32>
    %24 = vector.shape_cast %23 : vector<2x1x256xf32> to vector<2x256xf32>
    %cst_15 = arith.constant dense<0.000000e+00> : vector<2x256xf32>
    %25 = tpu.matmul %20, %19, %cst_15 {dimension_numbers = #tpu.dot_dimension_numbers<[1], [0], [0], [1], [0, 0, 1, 1], [], []>} : vector<2x64xf32>, vector<64x256xf32>, vector<2x256xf32> -> vector<2x256xf32>
    %26 = arith.addf %24, %25 : vector<2x256xf32>
    %27 = vector.extract_strided_slice %26 {offsets = [0, 0], sizes = [2, 64], strides = [1, 1]} : vector<2x256xf32> to vector<2x64xf32>
    %28 = arith.negf %27 : vector<2x64xf32>
    %29 = math.exp %28 : vector<2x64xf32>
    %cst_16 = arith.constant 1.000000e+00 : f32
    %30 = vector.broadcast %cst_16 : f32 to vector<2x64xf32>
    %31 = arith.addf %30, %29 : vector<2x64xf32>
    %32 = arith.divf %30, %31 : vector<2x64xf32>
    %33 = vector.extract_strided_slice %26 {offsets = [0, 64], sizes = [2, 64], strides = [1, 1]} : vector<2x256xf32> to vector<2x64xf32>
    %34 = arith.negf %33 : vector<2x64xf32>
    %35 = math.exp %34 : vector<2x64xf32>
    %cst_17 = arith.constant 1.000000e+00 : f32
    %36 = vector.broadcast %cst_17 : f32 to vector<2x64xf32>
    %37 = arith.addf %36, %35 : vector<2x64xf32>
    %38 = arith.divf %36, %37 : vector<2x64xf32>
    %39 = vector.extract_strided_slice %26 {offsets = [0, 128], sizes = [2, 64], strides = [1, 1]} : vector<2x256xf32> to vector<2x64xf32>
    %40 = math.tanh %39 : vector<2x64xf32>
    %41 = vector.extract_strided_slice %26 {offsets = [0, 192], sizes = [2, 64], strides = [1, 1]} : vector<2x256xf32> to vector<2x64xf32>
    %42 = arith.negf %41 : vector<2x64xf32>
    %43 = math.exp %42 : vector<2x64xf32>
    %cst_18 = arith.constant 1.000000e+00 : f32
    %44 = vector.broadcast %cst_18 : f32 to vector<2x64xf32>
    %45 = arith.addf %44, %43 : vector<2x64xf32>
    %46 = arith.divf %44, %45 : vector<2x64xf32>
    %47 = arith.mulf %38, %21 : vector<2x64xf32>
    %48 = arith.mulf %32, %40 : vector<2x64xf32>
    %49 = arith.addf %47, %48 : vector<2x64xf32>
    %50 = math.tanh %49 : vector<2x64xf32>
    %51 = arith.mulf %46, %50 : vector<2x64xf32>
    %52 = arith.addf %22, %51 : vector<2x64xf32>
    %53 = vector.extract_strided_slice %18 {offsets = [0, 1, 0], sizes = [2, 1, 256], strides = [1, 1, 1]} : vector<2x8x256xf32> to vector<2x1x256xf32>
    %54 = vector.shape_cast %53 : vector<2x1x256xf32> to vector<2x256xf32>
    %cst_19 = arith.constant dense<0.000000e+00> : vector<2x256xf32>
    %55 = tpu.matmul %51, %19, %cst_19 {dimension_numbers = #tpu.dot_dimension_numbers<[1], [0], [0], [1], [0, 0, 1, 1], [], []>} : vector<2x64xf32>, vector<64x256xf32>, vector<2x256xf32> -> vector<2x256xf32>
    %56 = arith.addf %54, %55 : vector<2x256xf32>
    %57 = vector.extract_strided_slice %56 {offsets = [0, 0], sizes = [2, 64], strides = [1, 1]} : vector<2x256xf32> to vector<2x64xf32>
    %58 = arith.negf %57 : vector<2x64xf32>
    %59 = math.exp %58 : vector<2x64xf32>
    %cst_20 = arith.constant 1.000000e+00 : f32
    %60 = vector.broadcast %cst_20 : f32 to vector<2x64xf32>
    %61 = arith.addf %60, %59 : vector<2x64xf32>
    %62 = arith.divf %60, %61 : vector<2x64xf32>
    %63 = vector.extract_strided_slice %56 {offsets = [0, 64], sizes = [2, 64], strides = [1, 1]} : vector<2x256xf32> to vector<2x64xf32>
    %64 = arith.negf %63 : vector<2x64xf32>
    %65 = math.exp %64 : vector<2x64xf32>
    %cst_21 = arith.constant 1.000000e+00 : f32
    %66 = vector.broadcast %cst_21 : f32 to vector<2x64xf32>
    %67 = arith.addf %66, %65 : vector<2x64xf32>
    %68 = arith.divf %66, %67 : vector<2x64xf32>
    %69 = vector.extract_strided_slice %56 {offsets = [0, 128], sizes = [2, 64], strides = [1, 1]} : vector<2x256xf32> to vector<2x64xf32>
    %70 = math.tanh %69 : vector<2x64xf32>
    %71 = vector.extract_strided_slice %56 {offsets = [0, 192], sizes = [2, 64], strides = [1, 1]} : vector<2x256xf32> to vector<2x64xf32>
    %72 = arith.negf %71 : vector<2x64xf32>
    %73 = math.exp %72 : vector<2x64xf32>
    %cst_22 = arith.constant 1.000000e+00 : f32
    %74 = vector.broadcast %cst_22 : f32 to vector<2x64xf32>
    %75 = arith.addf %74, %73 : vector<2x64xf32>
    %76 = arith.divf %74, %75 : vector<2x64xf32>
    %77 = arith.mulf %68, %49 : vector<2x64xf32>
    %78 = arith.mulf %62, %70 : vector<2x64xf32>
    %79 = arith.addf %77, %78 : vector<2x64xf32>
    %80 = math.tanh %79 : vector<2x64xf32>
    %81 = arith.mulf %76, %80 : vector<2x64xf32>
    %82 = arith.addf %52, %81 : vector<2x64xf32>
    %83 = vector.extract_strided_slice %18 {offsets = [0, 2, 0], sizes = [2, 1, 256], strides = [1, 1, 1]} : vector<2x8x256xf32> to vector<2x1x256xf32>
    %84 = vector.shape_cast %83 : vector<2x1x256xf32> to vector<2x256xf32>
    %cst_23 = arith.constant dense<0.000000e+00> : vector<2x256xf32>
    %85 = tpu.matmul %81, %19, %cst_23 {dimension_numbers = #tpu.dot_dimension_numbers<[1], [0], [0], [1], [0, 0, 1, 1], [], []>} : vector<2x64xf32>, vector<64x256xf32>, vector<2x256xf32> -> vector<2x256xf32>
    %86 = arith.addf %84, %85 : vector<2x256xf32>
    %87 = vector.extract_strided_slice %86 {offsets = [0, 0], sizes = [2, 64], strides = [1, 1]} : vector<2x256xf32> to vector<2x64xf32>
    %88 = arith.negf %87 : vector<2x64xf32>
    %89 = math.exp %88 : vector<2x64xf32>
    %cst_24 = arith.constant 1.000000e+00 : f32
    %90 = vector.broadcast %cst_24 : f32 to vector<2x64xf32>
    %91 = arith.addf %90, %89 : vector<2x64xf32>
    %92 = arith.divf %90, %91 : vector<2x64xf32>
    %93 = vector.extract_strided_slice %86 {offsets = [0, 64], sizes = [2, 64], strides = [1, 1]} : vector<2x256xf32> to vector<2x64xf32>
    %94 = arith.negf %93 : vector<2x64xf32>
    %95 = math.exp %94 : vector<2x64xf32>
    %cst_25 = arith.constant 1.000000e+00 : f32
    %96 = vector.broadcast %cst_25 : f32 to vector<2x64xf32>
    %97 = arith.addf %96, %95 : vector<2x64xf32>
    %98 = arith.divf %96, %97 : vector<2x64xf32>
    %99 = vector.extract_strided_slice %86 {offsets = [0, 128], sizes = [2, 64], strides = [1, 1]} : vector<2x256xf32> to vector<2x64xf32>
    %100 = math.tanh %99 : vector<2x64xf32>
    %101 = vector.extract_strided_slice %86 {offsets = [0, 192], sizes = [2, 64], strides = [1, 1]} : vector<2x256xf32> to vector<2x64xf32>
    %102 = arith.negf %101 : vector<2x64xf32>
    %103 = math.exp %102 : vector<2x64xf32>
    %cst_26 = arith.constant 1.000000e+00 : f32
    %104 = vector.broadcast %cst_26 : f32 to vector<2x64xf32>
    %105 = arith.addf %104, %103 : vector<2x64xf32>
    %106 = arith.divf %104, %105 : vector<2x64xf32>
    %107 = arith.mulf %98, %79 : vector<2x64xf32>
    %108 = arith.mulf %92, %100 : vector<2x64xf32>
    %109 = arith.addf %107, %108 : vector<2x64xf32>
    %110 = math.tanh %109 : vector<2x64xf32>
    %111 = arith.mulf %106, %110 : vector<2x64xf32>
    %112 = arith.addf %82, %111 : vector<2x64xf32>
    %113 = vector.extract_strided_slice %18 {offsets = [0, 3, 0], sizes = [2, 1, 256], strides = [1, 1, 1]} : vector<2x8x256xf32> to vector<2x1x256xf32>
    %114 = vector.shape_cast %113 : vector<2x1x256xf32> to vector<2x256xf32>
    %cst_27 = arith.constant dense<0.000000e+00> : vector<2x256xf32>
    %115 = tpu.matmul %111, %19, %cst_27 {dimension_numbers = #tpu.dot_dimension_numbers<[1], [0], [0], [1], [0, 0, 1, 1], [], []>} : vector<2x64xf32>, vector<64x256xf32>, vector<2x256xf32> -> vector<2x256xf32>
    %116 = arith.addf %114, %115 : vector<2x256xf32>
    %117 = vector.extract_strided_slice %116 {offsets = [0, 0], sizes = [2, 64], strides = [1, 1]} : vector<2x256xf32> to vector<2x64xf32>
    %118 = arith.negf %117 : vector<2x64xf32>
    %119 = math.exp %118 : vector<2x64xf32>
    %cst_28 = arith.constant 1.000000e+00 : f32
    %120 = vector.broadcast %cst_28 : f32 to vector<2x64xf32>
    %121 = arith.addf %120, %119 : vector<2x64xf32>
    %122 = arith.divf %120, %121 : vector<2x64xf32>
    %123 = vector.extract_strided_slice %116 {offsets = [0, 64], sizes = [2, 64], strides = [1, 1]} : vector<2x256xf32> to vector<2x64xf32>
    %124 = arith.negf %123 : vector<2x64xf32>
    %125 = math.exp %124 : vector<2x64xf32>
    %cst_29 = arith.constant 1.000000e+00 : f32
    %126 = vector.broadcast %cst_29 : f32 to vector<2x64xf32>
    %127 = arith.addf %126, %125 : vector<2x64xf32>
    %128 = arith.divf %126, %127 : vector<2x64xf32>
    %129 = vector.extract_strided_slice %116 {offsets = [0, 128], sizes = [2, 64], strides = [1, 1]} : vector<2x256xf32> to vector<2x64xf32>
    %130 = math.tanh %129 : vector<2x64xf32>
    %131 = vector.extract_strided_slice %116 {offsets = [0, 192], sizes = [2, 64], strides = [1, 1]} : vector<2x256xf32> to vector<2x64xf32>
    %132 = arith.negf %131 : vector<2x64xf32>
    %133 = math.exp %132 : vector<2x64xf32>
    %cst_30 = arith.constant 1.000000e+00 : f32
    %134 = vector.broadcast %cst_30 : f32 to vector<2x64xf32>
    %135 = arith.addf %134, %133 : vector<2x64xf32>
    %136 = arith.divf %134, %135 : vector<2x64xf32>
    %137 = arith.mulf %128, %109 : vector<2x64xf32>
    %138 = arith.mulf %122, %130 : vector<2x64xf32>
    %139 = arith.addf %137, %138 : vector<2x64xf32>
    %140 = math.tanh %139 : vector<2x64xf32>
    %141 = arith.mulf %136, %140 : vector<2x64xf32>
    %142 = arith.addf %112, %141 : vector<2x64xf32>
    %143 = vector.extract_strided_slice %18 {offsets = [0, 4, 0], sizes = [2, 1, 256], strides = [1, 1, 1]} : vector<2x8x256xf32> to vector<2x1x256xf32>
    %144 = vector.shape_cast %143 : vector<2x1x256xf32> to vector<2x256xf32>
    %cst_31 = arith.constant dense<0.000000e+00> : vector<2x256xf32>
    %145 = tpu.matmul %141, %19, %cst_31 {dimension_numbers = #tpu.dot_dimension_numbers<[1], [0], [0], [1], [0, 0, 1, 1], [], []>} : vector<2x64xf32>, vector<64x256xf32>, vector<2x256xf32> -> vector<2x256xf32>
    %146 = arith.addf %144, %145 : vector<2x256xf32>
    %147 = vector.extract_strided_slice %146 {offsets = [0, 0], sizes = [2, 64], strides = [1, 1]} : vector<2x256xf32> to vector<2x64xf32>
    %148 = arith.negf %147 : vector<2x64xf32>
    %149 = math.exp %148 : vector<2x64xf32>
    %cst_32 = arith.constant 1.000000e+00 : f32
    %150 = vector.broadcast %cst_32 : f32 to vector<2x64xf32>
    %151 = arith.addf %150, %149 : vector<2x64xf32>
    %152 = arith.divf %150, %151 : vector<2x64xf32>
    %153 = vector.extract_strided_slice %146 {offsets = [0, 64], sizes = [2, 64], strides = [1, 1]} : vector<2x256xf32> to vector<2x64xf32>
    %154 = arith.negf %153 : vector<2x64xf32>
    %155 = math.exp %154 : vector<2x64xf32>
    %cst_33 = arith.constant 1.000000e+00 : f32
    %156 = vector.broadcast %cst_33 : f32 to vector<2x64xf32>
    %157 = arith.addf %156, %155 : vector<2x64xf32>
    %158 = arith.divf %156, %157 : vector<2x64xf32>
    %159 = vector.extract_strided_slice %146 {offsets = [0, 128], sizes = [2, 64], strides = [1, 1]} : vector<2x256xf32> to vector<2x64xf32>
    %160 = math.tanh %159 : vector<2x64xf32>
    %161 = vector.extract_strided_slice %146 {offsets = [0, 192], sizes = [2, 64], strides = [1, 1]} : vector<2x256xf32> to vector<2x64xf32>
    %162 = arith.negf %161 : vector<2x64xf32>
    %163 = math.exp %162 : vector<2x64xf32>
    %cst_34 = arith.constant 1.000000e+00 : f32
    %164 = vector.broadcast %cst_34 : f32 to vector<2x64xf32>
    %165 = arith.addf %164, %163 : vector<2x64xf32>
    %166 = arith.divf %164, %165 : vector<2x64xf32>
    %167 = arith.mulf %158, %139 : vector<2x64xf32>
    %168 = arith.mulf %152, %160 : vector<2x64xf32>
    %169 = arith.addf %167, %168 : vector<2x64xf32>
    %170 = math.tanh %169 : vector<2x64xf32>
    %171 = arith.mulf %166, %170 : vector<2x64xf32>
    %172 = arith.addf %142, %171 : vector<2x64xf32>
    %173 = vector.extract_strided_slice %18 {offsets = [0, 5, 0], sizes = [2, 1, 256], strides = [1, 1, 1]} : vector<2x8x256xf32> to vector<2x1x256xf32>
    %174 = vector.shape_cast %173 : vector<2x1x256xf32> to vector<2x256xf32>
    %cst_35 = arith.constant dense<0.000000e+00> : vector<2x256xf32>
    %175 = tpu.matmul %171, %19, %cst_35 {dimension_numbers = #tpu.dot_dimension_numbers<[1], [0], [0], [1], [0, 0, 1, 1], [], []>} : vector<2x64xf32>, vector<64x256xf32>, vector<2x256xf32> -> vector<2x256xf32>
    %176 = arith.addf %174, %175 : vector<2x256xf32>
    %177 = vector.extract_strided_slice %176 {offsets = [0, 0], sizes = [2, 64], strides = [1, 1]} : vector<2x256xf32> to vector<2x64xf32>
    %178 = arith.negf %177 : vector<2x64xf32>
    %179 = math.exp %178 : vector<2x64xf32>
    %cst_36 = arith.constant 1.000000e+00 : f32
    %180 = vector.broadcast %cst_36 : f32 to vector<2x64xf32>
    %181 = arith.addf %180, %179 : vector<2x64xf32>
    %182 = arith.divf %180, %181 : vector<2x64xf32>
    %183 = vector.extract_strided_slice %176 {offsets = [0, 64], sizes = [2, 64], strides = [1, 1]} : vector<2x256xf32> to vector<2x64xf32>
    %184 = arith.negf %183 : vector<2x64xf32>
    %185 = math.exp %184 : vector<2x64xf32>
    %cst_37 = arith.constant 1.000000e+00 : f32
    %186 = vector.broadcast %cst_37 : f32 to vector<2x64xf32>
    %187 = arith.addf %186, %185 : vector<2x64xf32>
    %188 = arith.divf %186, %187 : vector<2x64xf32>
    %189 = vector.extract_strided_slice %176 {offsets = [0, 128], sizes = [2, 64], strides = [1, 1]} : vector<2x256xf32> to vector<2x64xf32>
    %190 = math.tanh %189 : vector<2x64xf32>
    %191 = vector.extract_strided_slice %176 {offsets = [0, 192], sizes = [2, 64], strides = [1, 1]} : vector<2x256xf32> to vector<2x64xf32>
    %192 = arith.negf %191 : vector<2x64xf32>
    %193 = math.exp %192 : vector<2x64xf32>
    %cst_38 = arith.constant 1.000000e+00 : f32
    %194 = vector.broadcast %cst_38 : f32 to vector<2x64xf32>
    %195 = arith.addf %194, %193 : vector<2x64xf32>
    %196 = arith.divf %194, %195 : vector<2x64xf32>
    %197 = arith.mulf %188, %169 : vector<2x64xf32>
    %198 = arith.mulf %182, %190 : vector<2x64xf32>
    %199 = arith.addf %197, %198 : vector<2x64xf32>
    %200 = math.tanh %199 : vector<2x64xf32>
    %201 = arith.mulf %196, %200 : vector<2x64xf32>
    %202 = arith.addf %172, %201 : vector<2x64xf32>
    %203 = vector.extract_strided_slice %18 {offsets = [0, 6, 0], sizes = [2, 1, 256], strides = [1, 1, 1]} : vector<2x8x256xf32> to vector<2x1x256xf32>
    %204 = vector.shape_cast %203 : vector<2x1x256xf32> to vector<2x256xf32>
    %cst_39 = arith.constant dense<0.000000e+00> : vector<2x256xf32>
    %205 = tpu.matmul %201, %19, %cst_39 {dimension_numbers = #tpu.dot_dimension_numbers<[1], [0], [0], [1], [0, 0, 1, 1], [], []>} : vector<2x64xf32>, vector<64x256xf32>, vector<2x256xf32> -> vector<2x256xf32>
    %206 = arith.addf %204, %205 : vector<2x256xf32>
    %207 = vector.extract_strided_slice %206 {offsets = [0, 0], sizes = [2, 64], strides = [1, 1]} : vector<2x256xf32> to vector<2x64xf32>
    %208 = arith.negf %207 : vector<2x64xf32>
    %209 = math.exp %208 : vector<2x64xf32>
    %cst_40 = arith.constant 1.000000e+00 : f32
    %210 = vector.broadcast %cst_40 : f32 to vector<2x64xf32>
    %211 = arith.addf %210, %209 : vector<2x64xf32>
    %212 = arith.divf %210, %211 : vector<2x64xf32>
    %213 = vector.extract_strided_slice %206 {offsets = [0, 64], sizes = [2, 64], strides = [1, 1]} : vector<2x256xf32> to vector<2x64xf32>
    %214 = arith.negf %213 : vector<2x64xf32>
    %215 = math.exp %214 : vector<2x64xf32>
    %cst_41 = arith.constant 1.000000e+00 : f32
    %216 = vector.broadcast %cst_41 : f32 to vector<2x64xf32>
    %217 = arith.addf %216, %215 : vector<2x64xf32>
    %218 = arith.divf %216, %217 : vector<2x64xf32>
    %219 = vector.extract_strided_slice %206 {offsets = [0, 128], sizes = [2, 64], strides = [1, 1]} : vector<2x256xf32> to vector<2x64xf32>
    %220 = math.tanh %219 : vector<2x64xf32>
    %221 = vector.extract_strided_slice %206 {offsets = [0, 192], sizes = [2, 64], strides = [1, 1]} : vector<2x256xf32> to vector<2x64xf32>
    %222 = arith.negf %221 : vector<2x64xf32>
    %223 = math.exp %222 : vector<2x64xf32>
    %cst_42 = arith.constant 1.000000e+00 : f32
    %224 = vector.broadcast %cst_42 : f32 to vector<2x64xf32>
    %225 = arith.addf %224, %223 : vector<2x64xf32>
    %226 = arith.divf %224, %225 : vector<2x64xf32>
    %227 = arith.mulf %218, %199 : vector<2x64xf32>
    %228 = arith.mulf %212, %220 : vector<2x64xf32>
    %229 = arith.addf %227, %228 : vector<2x64xf32>
    %230 = math.tanh %229 : vector<2x64xf32>
    %231 = arith.mulf %226, %230 : vector<2x64xf32>
    %232 = arith.addf %202, %231 : vector<2x64xf32>
    %233 = vector.extract_strided_slice %18 {offsets = [0, 7, 0], sizes = [2, 1, 256], strides = [1, 1, 1]} : vector<2x8x256xf32> to vector<2x1x256xf32>
    %234 = vector.shape_cast %233 : vector<2x1x256xf32> to vector<2x256xf32>
    %cst_43 = arith.constant dense<0.000000e+00> : vector<2x256xf32>
    %235 = tpu.matmul %231, %19, %cst_43 {dimension_numbers = #tpu.dot_dimension_numbers<[1], [0], [0], [1], [0, 0, 1, 1], [], []>} : vector<2x64xf32>, vector<64x256xf32>, vector<2x256xf32> -> vector<2x256xf32>
    %236 = arith.addf %234, %235 : vector<2x256xf32>
    %237 = vector.extract_strided_slice %236 {offsets = [0, 0], sizes = [2, 64], strides = [1, 1]} : vector<2x256xf32> to vector<2x64xf32>
    %238 = arith.negf %237 : vector<2x64xf32>
    %239 = math.exp %238 : vector<2x64xf32>
    %cst_44 = arith.constant 1.000000e+00 : f32
    %240 = vector.broadcast %cst_44 : f32 to vector<2x64xf32>
    %241 = arith.addf %240, %239 : vector<2x64xf32>
    %242 = arith.divf %240, %241 : vector<2x64xf32>
    %243 = vector.extract_strided_slice %236 {offsets = [0, 64], sizes = [2, 64], strides = [1, 1]} : vector<2x256xf32> to vector<2x64xf32>
    %244 = arith.negf %243 : vector<2x64xf32>
    %245 = math.exp %244 : vector<2x64xf32>
    %cst_45 = arith.constant 1.000000e+00 : f32
    %246 = vector.broadcast %cst_45 : f32 to vector<2x64xf32>
    %247 = arith.addf %246, %245 : vector<2x64xf32>
    %248 = arith.divf %246, %247 : vector<2x64xf32>
    %249 = vector.extract_strided_slice %236 {offsets = [0, 128], sizes = [2, 64], strides = [1, 1]} : vector<2x256xf32> to vector<2x64xf32>
    %250 = math.tanh %249 : vector<2x64xf32>
    %251 = vector.extract_strided_slice %236 {offsets = [0, 192], sizes = [2, 64], strides = [1, 1]} : vector<2x256xf32> to vector<2x64xf32>
    %252 = arith.negf %251 : vector<2x64xf32>
    %253 = math.exp %252 : vector<2x64xf32>
    %cst_46 = arith.constant 1.000000e+00 : f32
    %254 = vector.broadcast %cst_46 : f32 to vector<2x64xf32>
    %255 = arith.addf %254, %253 : vector<2x64xf32>
    %256 = arith.divf %254, %255 : vector<2x64xf32>
    %257 = arith.mulf %248, %229 : vector<2x64xf32>
    %258 = arith.mulf %242, %250 : vector<2x64xf32>
    %259 = arith.addf %257, %258 : vector<2x64xf32>
    %260 = math.tanh %259 : vector<2x64xf32>
    %261 = arith.mulf %256, %260 : vector<2x64xf32>
    %262 = arith.addf %232, %261 : vector<2x64xf32>
    %cst_47 = arith.constant 1.250000e-01 : f32
    %263 = vector.broadcast %cst_47 : f32 to vector<2x64xf32>
    %264 = arith.mulf %262, %263 : vector<2x64xf32>
    %c0_48 = arith.constant 0 : index
    %c0_49 = arith.constant 0 : index
    %265 = vector.load %arg6[%c0_48, %c0_49] : memref<64x256xf32, #tpu.memory_space<vmem>>, vector<64x256xf32>
    %cst_50 = arith.constant dense<0.000000e+00> : vector<2x256xf32>
    %266 = tpu.matmul %264, %265, %cst_50 {dimension_numbers = #tpu.dot_dimension_numbers<[1], [0], [0], [1], [0, 0, 1, 1], [], []>} : vector<2x64xf32>, vector<64x256xf32>, vector<2x256xf32> -> vector<2x256xf32>
    %c0_51 = arith.constant 0 : index
    %c0_52 = arith.constant 0 : index
    %267 = vector.load %arg7[%c0_51, %c0_52] : memref<1x256xf32, #tpu.memory_space<vmem>>, vector<1x256xf32>
    %268 = vector.broadcast %267 : vector<1x256xf32> to vector<2x256xf32>
    %269 = arith.addf %266, %268 : vector<2x256xf32>
    %c0_53 = arith.constant 0 : index
    %c0_54 = arith.constant 0 : index
    %270 = vector.load %arg8[%c0_53, %c0_54] : memref<2x256xf32, #tpu.memory_space<vmem>>, vector<2x256xf32>
    tpu.vector_store %arg8[%c0_53, %c0_54], %269 {strides = array<i32>} : memref<2x256xf32, #tpu.memory_space<vmem>>, vector<2x256xf32>,
    return
  }
  func.func @transform_0(%arg0: i32) -> (i32, i32) {
    %c0_i32 = arith.constant 0 : i32
    %c0_i32_0 = arith.constant 0 : i32
    return %arg0, %c0_i32 : i32, i32
  }
  func.func @transform_1(%arg0: i32) -> (i32, i32) {
    %c0_i32 = arith.constant 0 : i32
    %c0_i32_0 = arith.constant 0 : i32
    %c0_i32_1 = arith.constant 0 : i32
    return %c0_i32, %c0_i32_0 : i32, i32
  }
  func.func @transform_2(%arg0: i32) -> (i32, i32) {
    %c0_i32 = arith.constant 0 : i32
    %c0_i32_0 = arith.constant 0 : i32
    %c0_i32_1 = arith.constant 0 : i32
    return %c0_i32, %c0_i32_0 : i32, i32
  }
  func.func @transform_3(%arg0: i32) -> (i32, i32) {
    %c0_i32 = arith.constant 0 : i32
    %c0_i32_0 = arith.constant 0 : i32
    %c0_i32_1 = arith.constant 0 : i32
    return %c0_i32, %c0_i32_0 : i32, i32
  }
  func.func @transform_4(%arg0: i32) -> (i32, i32) {
    %c0_i32 = arith.constant 0 : i32
    %c0_i32_0 = arith.constant 0 : i32
    %c0_i32_1 = arith.constant 0 : i32
    return %c0_i32, %c0_i32_0 : i32, i32
  }
  func.func @transform_5(%arg0: i32) -> (i32, i32) {
    %c0_i32 = arith.constant 0 : i32
    %c0_i32_0 = arith.constant 0 : i32
    %c0_i32_1 = arith.constant 0 : i32
    return %c0_i32, %c0_i32_0 : i32, i32
  }
  func.func @transform_6(%arg0: i32) -> (i32, i32) {
    %c0_i32 = arith.constant 0 : i32
    %c0_i32_0 = arith.constant 0 : i32
    %c0_i32_1 = arith.constant 0 : i32
    return %c0_i32, %c0_i32_0 : i32, i32
  }
  func.func @transform_7(%arg0: i32) -> (i32, i32) {
    %c0_i32 = arith.constant 0 : i32
    %c0_i32_0 = arith.constant 0 : i32
    return %arg0, %c0_i32 : i32, i32
  }
}

</mosaic_0001>

<llo_original>
// kernel: model_forward.1
$region0: #{model_forward.1}
  #allocation0 [shape = 'u32[]', space=smem, size = 0x4, offset = 0x4, fixed_abs, tag = 'smem constant byte address 0x4 - core index']
  #allocation1 [shape = 'u32[72,128]{1,0:T(1,128)}', space=vmem, size = 0x9000, scoped, tag = 'internal scratch']
  %s0 = inlined_call_operand.vmem [shape: f32[16,400], index: 0, kind: input, shape index: {}]
  %s1 = inlined_call_operand.vmem [shape: f32[400,80], index: 1, kind: input, shape index: {}]
  %s2 = inlined_call_operand.vmem [shape: f32[40,256], index: 2, kind: input, shape index: {}]
  %s3 = inlined_call_operand.vmem [shape: f32[64,256], index: 3, kind: input, shape index: {}]
  %s4 = inlined_call_operand.vmem [shape: f32[1,256], index: 4, kind: input, shape index: {}]
  %s5 = inlined_call_operand.vmem [shape: f32[64,256], index: 5, kind: input, shape index: {}]
  %s6 = inlined_call_operand.vmem [shape: f32[1,256], index: 6, kind: input, shape index: {}]
  %s7 = inlined_call_operand.hbm [shape: f32[2,256], index: 7, kind: output, shape index: {}]
  %s8 = sld [smem:[#allocation0]]
  $region38: #{model_forward.1} parent=0
    _
  %s10 = ssub.s32 1, %s8
  %s11 = scalar_select 0, %s10, %s8
  $region1: #{model_forward.1} parent=0
    #allocation2 [shape = 'u8[2048]{0}', space=vmem, size = 0x800, scoped, tag = 'output window, operand 0, single buffered']
    #allocation3 [shape = 's32[1]{0}', space=sflag, size = 0x4, scoped, tag = 'scoped memory for model_forward.1']
    %12 = vsyncpa [#allocation3], 0
    // Predicated region
    $region2: #{model_forward.1} parent=1 // pred_check
      _
    $region3: #{model_forward.1} parent=1 // pred_check_branch
      %14 = sbr.rel (0) target = $region5
    $region4: #{model_forward.1} parent=1 // pred_region
      _
    $region5: #{model_forward.1} parent=1 // pred_fallthru
      _
    // Predicated region
    $region6: #{model_forward.1} parent=1 // pred_check
      _
    $region7: #{model_forward.1} parent=1 // pred_check_branch
      %16 = sbr.rel (0) target = $region9
    $region8: #{model_forward.1} parent=1 // pred_region
      _
    $region9: #{model_forward.1} parent=1 // pred_fallthru
      _
    // Predicated region
    $region10: #{model_forward.1} parent=1 // pred_check
      _
    $region11: #{model_forward.1} parent=1 // pred_check_branch
      %18 = sbr.rel (0) target = $region13
    $region12: #{model_forward.1} parent=1 // pred_region
      _
    $region13: #{model_forward.1} parent=1 // pred_fallthru
      _
    // Predicated region
    $region14: #{model_forward.1} parent=1 // pred_check
      _
    $region15: #{model_forward.1} parent=1 // pred_check_branch
      %20 = sbr.rel (0) target = $region17
    $region16: #{model_forward.1} parent=1 // pred_region
      _
    $region17: #{model_forward.1} parent=1 // pred_fallthru
      _
    // Predicated region
    $region18: #{model_forward.1} parent=1 // pred_check
      _
    $region19: #{model_forward.1} parent=1 // pred_check_branch
      %22 = sbr.rel (0) target = $region21
    $region20: #{model_forward.1} parent=1 // pred_region
      _
    $region21: #{model_forward.1} parent=1 // pred_fallthru
      _
    // Predicated region
    $region22: #{model_forward.1} parent=1 // pred_check
      _
    $region23: #{model_forward.1} parent=1 // pred_check_branch
      %24 = sbr.rel (0) target = $region25
    $region24: #{model_forward.1} parent=1 // pred_region
      _
    $region25: #{model_forward.1} parent=1 // pred_fallthru
      _
    // Predicated region
    $region26: #{model_forward.1} parent=1 // pred_check
      _
    $region27: #{model_forward.1} parent=1 // pred_check_branch
      %26 = sbr.rel (0) target = $region29
    $region28: #{model_forward.1} parent=1 // pred_region
      _
    $region29: #{model_forward.1} parent=1 // pred_fallthru
      _
    %v27 = vld [vmem:[%s0] sm:$0xff]
    %v28 = vld [vmem:[%s0 + $0x8] sm:$0xff]
    %v29 = vld [vmem:[%s0 + $0x10] sm:$0xff]
    %v30 = vld [vmem:[%s0 + $0x18] sm:$0xff]
    %v31 = vld [vmem:[%s0 + $0x20] sm:$0xff]
    %v32 = vld [vmem:[%s0 + $0x28] sm:$0xff]
    %v33 = vld [vmem:[%s0 + $0x30] sm:$0xff]
    %v34 = vld [vmem:[%s0 + $0x38] sm:$0xff]
    %v35 = vld [vmem:[%s1] sm:$0xff]
    %v36 = vld [vmem:[%s1 + $0x8] sm:$0xff]
    %v37 = vld [vmem:[%s1 + $0x10] sm:$0xff]
    %v38 = vld [vmem:[%s1 + $0x18] sm:$0xff]
    %v39 = vld [vmem:[%s1 + $0x20] sm:$0xff]
    %v40 = vld [vmem:[%s1 + $0x28] sm:$0xff]
    %v41 = vld [vmem:[%s1 + $0x30] sm:$0xff]
    %v42 = vld [vmem:[%s1 + $0x38] sm:$0xff]
    %v43 = vld [vmem:[%s1 + $0x40] sm:$0xff]
    %v44 = vld [vmem:[%s1 + $0x48] sm:$0xff]
    %v45 = vld [vmem:[%s1 + $0x50] sm:$0xff]
    %v46 = vld [vmem:[%s1 + $0x58] sm:$0xff]
    %v47 = vld [vmem:[%s1 + $0x60] sm:$0xff]
    %v48 = vld [vmem:[%s1 + $0x68] sm:$0xff]
    %v49 = vld [vmem:[%s1 + $0x70] sm:$0xff]
    %v50 = vld [vmem:[%s1 + $0x78] sm:$0xff]
    %v51 = vld [vmem:[%s1 + $0x80] sm:$0xff]
    %v52 = vld [vmem:[%s1 + $0x88] sm:$0xff]
    %v53 = vld [vmem:[%s1 + $0x90] sm:$0xff]
    %v54 = vld [vmem:[%s1 + $0x98] sm:$0xff]
    %v55 = vld [vmem:[%s1 + $0xa0] sm:$0xff]
    %v56 = vld [vmem:[%s1 + $0xa8] sm:$0xff]
    %v57 = vld [vmem:[%s1 + $0xb0] sm:$0xff]
    %v58 = vld [vmem:[%s1 + $0xb8] sm:$0xff]
    %v59 = vld [vmem:[%s1 + $0xc0] sm:$0xff]
    %v60 = vld [vmem:[%s1 + $0xc8] sm:$0xff]
    %v61 = vld [vmem:[%s1 + $0xd0] sm:$0xff]
    %v62 = vld [vmem:[%s1 + $0xd8] sm:$0xff]
    %v63 = vld [vmem:[%s1 + $0xe0] sm:$0xff]
    %v64 = vld [vmem:[%s1 + $0xe8] sm:$0xff]
    %v65 = vld [vmem:[%s1 + $0xf0] sm:$0xff]
    %v66 = vld [vmem:[%s1 + $0xf8] sm:$0xff]
    %v67 = vld [vmem:[%s1 + $0x100] sm:$0xff]
    %v68 = vld [vmem:[%s1 + $0x108] sm:$0xff]
    %v69 = vld [vmem:[%s1 + $0x110] sm:$0xff]
    %v70 = vld [vmem:[%s1 + $0x118] sm:$0xff]
    %v71 = vld [vmem:[%s1 + $0x120] sm:$0xff]
    %v72 = vld [vmem:[%s1 + $0x128] sm:$0xff]
    %v73 = vld [vmem:[%s1 + $0x130] sm:$0xff]
    %v74 = vld [vmem:[%s1 + $0x138] sm:$0xff]
    %v75 = vld [vmem:[%s1 + $0x140] sm:$0xff]
    %v76 = vld [vmem:[%s1 + $0x148] sm:$0xff]
    %v77 = vld [vmem:[%s1 + $0x150] sm:$0xff]
    %v78 = vld [vmem:[%s1 + $0x158] sm:$0xff]
    %v79 = vld [vmem:[%s1 + $0x160] sm:$0xff]
    %v80 = vld [vmem:[%s1 + $0x168] sm:$0xff]
    %v81 = vld [vmem:[%s1 + $0x170] sm:$0xff]
    %v82 = vld [vmem:[%s1 + $0x178] sm:$0xff]
    %v83 = vld [vmem:[%s1 + $0x180] sm:$0xff]
    %v84 = vld [vmem:[%s1 + $0x188] sm:$0xff]
    %vm85 = vcmask 130048
    %v87 = vsel %vm85, %v30, 0
    %v90 = vsel %vm85, %v34, 0
    %92 = vmatpush.msra.mxu0 %v50
    %93 = vmatpush.msra.mxu0 %v49
    %94 = vmatpush.msra.mxu0 %v48
    %95 = vmatpush.msra.mxu0 %v47
    %96 = vmatpush.msra.mxu0 %v46
    %97 = vmatpush.msra.mxu0 %v45
    %98 = vmatpush.msra.mxu0 %v44
    %99 = vmatpush.msra.mxu0 %v43
    %100 = vmatpush.msra.mxu0 %v42
    %101 = vmatpush.msra.mxu0 %v41
    %102 = vmatpush.msra.mxu0 %v40
    %103 = vmatpush.msra.mxu0 %v39
    %104 = vmatpush.msra.mxu0 %v38
    %105 = vmatpush.msra.mxu0 %v37
    %106 = vmatpush.msra.mxu0 %v36
    %107 = vmatpush.msra.mxu0 %v35
    %108 = vmatmul.f32.gmra.mxu0 %v27
    %v109 = vpop.f32.mrf.mxu0
    %v110 = vadd.f32 0.0, %v109
    %111 = vmatmul.f32.gmra.mxu0 %v31
    %v112 = vpop.f32.mrf.mxu0
    %v113 = vadd.f32 0.0, %v112
    %114 = vdwg.mxu0
    %115 = vmatpush.msra.mxu0 %v66
    %116 = vmatpush.msra.mxu0 %v65
    %117 = vmatpush.msra.mxu0 %v64
    %118 = vmatpush.msra.mxu0 %v63
    %119 = vmatpush.msra.mxu0 %v62
    %120 = vmatpush.msra.mxu0 %v61
    %121 = vmatpush.msra.mxu0 %v60
    %122 = vmatpush.msra.mxu0 %v59
    %123 = vmatpush.msra.mxu0 %v58
    %124 = vmatpush.msra.mxu0 %v57
    %125 = vmatpush.msra.mxu0 %v56
    %126 = vmatpush.msra.mxu0 %v55
    %127 = vmatpush.msra.mxu0 %v54
    %128 = vmatpush.msra.mxu0 %v53
    %129 = vmatpush.msra.mxu0 %v52
    %130 = vmatpush.msra.mxu0 %v51
    %131 = vmatmul.f32.gmra.mxu0 %v28
    %v132 = vpop.f32.mrf.mxu0
    %v133 = vadd.f32 %v110, %v132
    %134 = vmatmul.f32.gmra.mxu0 %v32
    %v135 = vpop.f32.mrf.mxu0
    %v136 = vadd.f32 %v113, %v135
    %137 = vdwg.mxu0
    %138 = vmatpush.msra.mxu0 %v82
    %139 = vmatpush.msra.mxu0 %v81
    %140 = vmatpush.msra.mxu0 %v80
    %141 = vmatpush.msra.mxu0 %v79
    %142 = vmatpush.msra.mxu0 %v78
    %143 = vmatpush.msra.mxu0 %v77
    %144 = vmatpush.msra.mxu0 %v76
    %145 = vmatpush.msra.mxu0 %v75
    %146 = vmatpush.msra.mxu0 %v74
    %147 = vmatpush.msra.mxu0 %v73
    %148 = vmatpush.msra.mxu0 %v72
    %149 = vmatpush.msra.mxu0 %v71
    %150 = vmatpush.msra.mxu0 %v70
    %151 = vmatpush.msra.mxu0 %v69
    %152 = vmatpush.msra.mxu0 %v68
    %153 = vmatpush.msra.mxu0 %v67
    %154 = vmatmul.f32.gmra.mxu0 %v29
    %v155 = vpop.f32.mrf.mxu0
    %v156 = vadd.f32 %v133, %v155
    %157 = vmatmul.f32.gmra.mxu0 %v33
    %v158 = vpop.f32.mrf.mxu0
    %v159 = vadd.f32 %v136, %v158
    %160 = vdwg.mxu0
    %161 = vmatpush.msra.mxu0 0.0
    %162 = vmatpush.msra.mxu0 0.0
    %163 = vmatpush.msra.mxu0 0.0
    %164 = vmatpush.msra.mxu0 0.0
    %165 = vmatpush.msra.mxu0 0.0
    %166 = vmatpush.msra.mxu0 0.0
    %167 = vmatpush.msra.mxu0 0.0
    %168 = vmatpush.msra.mxu0 0.0
    %169 = vmatpush.msra.mxu0 0.0
    %170 = vmatpush.msra.mxu0 0.0
    %171 = vmatpush.msra.mxu0 0.0
    %172 = vmatpush.msra.mxu0 0.0
    %173 = vmatpush.msra.mxu0 0.0
    %174 = vmatpush.msra.mxu0 0.0
    %175 = vmatpush.msra.mxu0 %v84
    %176 = vmatpush.msra.mxu0 %v83
    %177 = vmatmul.f32.gmra.mxu0 %v87
    %v178 = vpop.f32.mrf.mxu0
    %v179 = vadd.f32 %v156, %v178
    %180 = vmatmul.f32.gmra.mxu0 %v90
    %v181 = vpop.f32.mrf.mxu0
    %v182 = vadd.f32 %v159, %v181
    %183 = vdwg.mxu0
    %v184 = vmul.f32 %v179, %v179
    %v185 = vmul.f32 %v182, %v182
    %188 = vrot.lane.b32.xlu0 %v184, 88
    %v189 = vpop.permute.xlu0 %188
    %190 = vrot.lane.b32.xlu0 %v185, 88
    %v191 = vpop.permute.xlu0 %190
    %v194 = vadd.f32 %v184, %v189
    %v195 = vadd.f32 %v185, %v191
    %v196 = vadd.f32 %v194, 1e-09
    %v197 = vadd.f32 %v195, 1e-09
    %v198 = vlog2.pop %v196
    %v199 = vmul.f32 %v198, 0.6931472
    %v200 = vlog2.pop %v197
    %v201 = vmul.f32 %v200, 0.6931472
    %v202 = vmul.f32 %v199, 0.4342945
    %v203 = vmul.f32 %v201, 0.4342945
    %v204 = vld [vmem:[%s2] sm:$0xff]
    %v205 = vld [vmem:[%s2 + $0x8] sm:$0xff]
    %v206 = vld [vmem:[%s2 + $0x10] sm:$0xff]
    %v207 = vld [vmem:[%s2 + $0x18] sm:$0xff]
    %v208 = vld [vmem:[%s2 + $0x20] sm:$0xff]
    %v209 = vld [vmem:[%s2 + $0x28] sm:$0xff]
    %v210 = vld [vmem:[%s2 + $0x30] sm:$0xff]
    %v211 = vld [vmem:[%s2 + $0x38] sm:$0xff]
    %v212 = vld [vmem:[%s2 + $0x40] sm:$0xff]
    %v213 = vld [vmem:[%s2 + $0x48] sm:$0xff]
    %v214 = vld [vmem:[%s4] sm:$0x3]
    %v216 = vperm.slane %v214, 0
    %v217 = vperm.slane %v214, 1
    %vm220 = vcmask 326656
    %v222 = vsel %vm220, %v202, 0
    %v225 = vsel %vm220, %v203, 0
    %227 = vmatpush.msra.mxu0 0.0
    %228 = vmatpush.msra.mxu0 0.0
    %229 = vmatpush.msra.mxu0 0.0
    %230 = vmatpush.msra.mxu0 0.0
    %231 = vmatpush.msra.mxu0 0.0
    %232 = vmatpush.msra.mxu0 0.0
    %233 = vmatpush.msra.mxu0 0.0
    %234 = vmatpush.msra.mxu0 0.0
    %235 = vmatpush.msra.mxu0 0.0
    %236 = vmatpush.msra.mxu0 0.0
    %237 = vmatpush.msra.mxu0 0.0
    %238 = vmatpush.msra.mxu0 %v212
    %239 = vmatpush.msra.mxu0 %v210
    %240 = vmatpush.msra.mxu0 %v208
    %241 = vmatpush.msra.mxu0 %v206
    %242 = vmatpush.msra.mxu0 %v204
    %243 = vmatmul.f32.gmra.mxu0 %v222
    %v244 = vpop.f32.mrf.mxu0
    %v245 = vadd.f32 %v216, %v244
    %246 = vmatmul.f32.gmra.mxu0 %v225
    %v247 = vpop.f32.mrf.mxu0
    %v248 = vadd.f32 %v216, %v247
    %249 = vdwg.mxu0
    %250 = vmatpush.msra.mxu0 0.0
    %251 = vmatpush.msra.mxu0 0.0
    %252 = vmatpush.msra.mxu0 0.0
    %253 = vmatpush.msra.mxu0 0.0
    %254 = vmatpush.msra.mxu0 0.0
    %255 = vmatpush.msra.mxu0 0.0
    %256 = vmatpush.msra.mxu0 0.0
    %257 = vmatpush.msra.mxu0 0.0
    %258 = vmatpush.msra.mxu0 0.0
    %259 = vmatpush.msra.mxu0 0.0
    %260 = vmatpush.msra.mxu0 0.0
    %261 = vmatpush.msra.mxu0 %v213
    %262 = vmatpush.msra.mxu0 %v211
    %263 = vmatpush.msra.mxu0 %v209
    %264 = vmatpush.msra.mxu0 %v207
    %265 = vmatpush.msra.mxu0 %v205
    %266 = vmatmul.f32.gmra.mxu0 %v222
    %v267 = vpop.f32.mrf.mxu0
    %v268 = vadd.f32 %v217, %v267
    %269 = vmatmul.f32.gmra.mxu0 %v225
    %v270 = vpop.f32.mrf.mxu0
    %v271 = vadd.f32 %v217, %v270
    %272 = vdwg.mxu0
    %v273 = vld [vmem:[%s3] sm:$0xff]
    %v274 = vld [vmem:[%s3 + $0x8] sm:$0xff]
    %v275 = vld [vmem:[%s3 + $0x10] sm:$0xff]
    %v276 = vld [vmem:[%s3 + $0x18] sm:$0xff]
    %v277 = vld [vmem:[%s3 + $0x20] sm:$0xff]
    %v278 = vld [vmem:[%s3 + $0x28] sm:$0xff]
    %v279 = vld [vmem:[%s3 + $0x30] sm:$0xff]
    %v280 = vld [vmem:[%s3 + $0x38] sm:$0xff]
    %v281 = vld [vmem:[%s3 + $0x40] sm:$0xff]
    %v282 = vld [vmem:[%s3 + $0x48] sm:$0xff]
    %v283 = vld [vmem:[%s3 + $0x50] sm:$0xff]
    %v284 = vld [vmem:[%s3 + $0x58] sm:$0xff]
    %v285 = vld [vmem:[%s3 + $0x60] sm:$0xff]
    %v286 = vld [vmem:[%s3 + $0x68] sm:$0xff]
    %v287 = vld [vmem:[%s3 + $0x70] sm:$0xff]
    %v288 = vld [vmem:[%s3 + $0x78] sm:$0xff]
    %vm289 = vcmask 523264
    %v291 = vsel %vm289, 0.0, 0
    %293 = vmatpush.msra.mxu0 0.0
    %294 = vmatpush.msra.mxu0 0.0
    %295 = vmatpush.msra.mxu0 0.0
    %296 = vmatpush.msra.mxu0 0.0
    %297 = vmatpush.msra.mxu0 0.0
    %298 = vmatpush.msra.mxu0 0.0
    %299 = vmatpush.msra.mxu0 0.0
    %300 = vmatpush.msra.mxu0 0.0
    %301 = vmatpush.msra.mxu0 %v287
    %302 = vmatpush.msra.mxu0 %v285
    %303 = vmatpush.msra.mxu0 %v283
    %304 = vmatpush.msra.mxu0 %v281
    %305 = vmatpush.msra.mxu0 %v279
    %306 = vmatpush.msra.mxu0 %v277
    %307 = vmatpush.msra.mxu0 %v275
    %308 = vmatpush.msra.mxu0 %v273
    %309 = vmatmul.f32.gmra.mxu0 %v291
    %v310 = vpop.f32.mrf.mxu0
    %v311 = vadd.f32 0.0, %v310
    %312 = vdwg.mxu0
    %313 = vmatpush.msra.mxu0 0.0
    %314 = vmatpush.msra.mxu0 0.0
    %315 = vmatpush.msra.mxu0 0.0
    %316 = vmatpush.msra.mxu0 0.0
    %317 = vmatpush.msra.mxu0 0.0
    %318 = vmatpush.msra.mxu0 0.0
    %319 = vmatpush.msra.mxu0 0.0
    %320 = vmatpush.msra.mxu0 0.0
    %321 = vmatpush.msra.mxu0 %v288
    %322 = vmatpush.msra.mxu0 %v286
    %323 = vmatpush.msra.mxu0 %v284
    %324 = vmatpush.msra.mxu0 %v282
    %325 = vmatpush.msra.mxu0 %v280
    %326 = vmatpush.msra.mxu0 %v278
    %327 = vmatpush.msra.mxu0 %v276
    %328 = vmatpush.msra.mxu0 %v274
    %329 = vmatmul.f32.gmra.mxu0 %v291
    %v330 = vpop.f32.mrf.mxu0
    %v331 = vadd.f32 0.0, %v330
    %332 = vdwg.mxu0
    %v335 = vrot.slane %v311, 1
    %v336 = vrot.slane %v331, 1
    %v341 = vadd.f32 %v245, %v311
    %v342 = vadd.f32 %v268, %v331
    %v343 = vadd.f32 %v248, %v335
    %v344 = vadd.f32 %v271, %v336
    %v345 = vxor.u32 %v341, 2147483648
    %v346 = vxor.u32 %v343, 2147483648
    %v347 = vmul.f32 %v345, 1.442695
    %v348 = vpow.pop %v347
    %v349 = vmul.f32 %v346, 1.442695
    %v350 = vpow.pop %v349
    %v351 = vadd.f32 %v348, 1.0
    %v352 = vadd.f32 %v350, 1.0
    %v353 = vrcp.pop %v351
    %v354 = vmul.f32 %v351, %v353
    %v355 = vsub.f32 1.0, %v354
    %v356 = vmul.f32 %v353, %v355
    %v357 = vadd.f32 %v353, %v356
    %vm358 = vweird.f32 %v351
    %vm359 = vweird.f32 %v353
    %vm360 = vmor %vm358, %vm359
    %v361 = vsel %vm360, %v353, %v357
    %v362 = vand.u32 2147483647, %v351
    %vm363 = vcmp.eq.f32.partialorder %v362, 8.507059e+37
    %v364 = vand.u32 %v351, 2147483648
    %v365 = vor.u32 1.1754944e-38, %v364
    %v366 = vsel %vm363, %v365, %v361
    %v367 = vmul.f32 1.0, %v366
    %v368 = vrcp.pop %v352
    %v369 = vmul.f32 %v352, %v368
    %v370 = vsub.f32 1.0, %v369
    %v371 = vmul.f32 %v368, %v370
    %v372 = vadd.f32 %v368, %v371
    %vm373 = vweird.f32 %v352
    %vm374 = vweird.f32 %v368
    %vm375 = vmor %vm373, %vm374
    %v376 = vsel %vm375, %v368, %v372
    %v377 = vand.u32 2147483647, %v352
    %vm378 = vcmp.eq.f32.partialorder %v377, 8.507059e+37
    %v379 = vand.u32 %v352, 2147483648
    %v380 = vor.u32 1.1754944e-38, %v379
    %v381 = vsel %vm378, %v380, %v376
    %v382 = vmul.f32 1.0, %v381
    %v383 = vtanh.pop %v342
    %v384 = vtanh.pop %v344
    %v385 = vxor.u32 %v342, 2147483648
    %v386 = vxor.u32 %v344, 2147483648
    %v387 = vmul.f32 %v385, 1.442695
    %v388 = vpow.pop %v387
    %v389 = vmul.f32 %v386, 1.442695
    %v390 = vpow.pop %v389
    %v391 = vadd.f32 %v388, 1.0
    %v392 = vadd.f32 %v390, 1.0
    %v393 = vrcp.pop %v391
    %v394 = vmul.f32 %v391, %v393
    %v395 = vsub.f32 1.0, %v394
    %v396 = vmul.f32 %v393, %v395
    %v397 = vadd.f32 %v393, %v396
    %vm398 = vweird.f32 %v391
    %vm399 = vweird.f32 %v393
    %vm400 = vmor %vm398, %vm399
    %v401 = vsel %vm400, %v393, %v397
    %v402 = vand.u32 2147483647, %v391
    %vm403 = vcmp.eq.f32.partialorder %v402, 8.507059e+37
    %v404 = vand.u32 %v391, 2147483648
    %v405 = vor.u32 1.1754944e-38, %v404
    %v406 = vsel %vm403, %v405, %v401
    %v407 = vmul.f32 1.0, %v406
    %v408 = vrcp.pop %v392
    %v409 = vmul.f32 %v392, %v408
    %v410 = vsub.f32 1.0, %v409
    %v411 = vmul.f32 %v408, %v410
    %v412 = vadd.f32 %v408, %v411
    %vm413 = vweird.f32 %v392
    %vm414 = vweird.f32 %v408
    %vm415 = vmor %vm413, %vm414
    %v416 = vsel %vm415, %v408, %v412
    %v417 = vand.u32 2147483647, %v392
    %vm418 = vcmp.eq.f32.partialorder %v417, 8.507059e+37
    %v419 = vand.u32 %v392, 2147483648
    %v420 = vor.u32 1.1754944e-38, %v419
    %v421 = vsel %vm418, %v420, %v416
    %v422 = vmul.f32 1.0, %v421
    %v423 = vmul.f32 %v367, 0.0
    %v424 = vmul.f32 %v382, 0.0
    %v425 = vmul.f32 %v367, %v383
    %v426 = vmul.f32 %v382, %v384
    %429 = vrot.lane.b32.xlu0 %v425, 64
    %v430 = vpop.permute.xlu0 %429
    %431 = vrot.lane.b32.xlu0 %v426, 64
    %v432 = vpop.permute.xlu0 %431
    %v435 = vadd.f32 %v423, %v430
    %v436 = vadd.f32 %v424, %v432
    %v437 = vtanh.pop %v435
    %v438 = vtanh.pop %v436
    %v439 = vmul.f32 %v407, %v437
    %v440 = vmul.f32 %v422, %v438
    %v441 = vadd.f32 %v439, 0.0
    %v442 = vadd.f32 %v440, 0.0
    %v445 = vrot.slane %v440, 7
    %vm446 = vcmask 1041409
    %v447 = vsel %vm446, %v445, %v439
    %448 = vrot.lane.b32.xlu0 %v447, 64
    %v449 = vpop.permute.xlu0 %448
    %v450 = vsel %vm289, %v449, 0
    %452 = vmatpush.msra.mxu0 0.0
    %453 = vmatpush.msra.mxu0 0.0
    %454 = vmatpush.msra.mxu0 0.0
    %455 = vmatpush.msra.mxu0 0.0
    %456 = vmatpush.msra.mxu0 0.0
    %457 = vmatpush.msra.mxu0 0.0
    %458 = vmatpush.msra.mxu0 0.0
    %459 = vmatpush.msra.mxu0 0.0
    %460 = vmatpush.msra.mxu0 %v287
    %461 = vmatpush.msra.mxu0 %v285
    %462 = vmatpush.msra.mxu0 %v283
    %463 = vmatpush.msra.mxu0 %v281
    %464 = vmatpush.msra.mxu0 %v279
    %465 = vmatpush.msra.mxu0 %v277
    %466 = vmatpush.msra.mxu0 %v275
    %467 = vmatpush.msra.mxu0 %v273
    %468 = vmatmul.f32.gmra.mxu0 %v450
    %v469 = vpop.f32.mrf.mxu0
    %v470 = vadd.f32 0.0, %v469
    %471 = vdwg.mxu0
    %472 = vmatpush.msra.mxu0 0.0
    %473 = vmatpush.msra.mxu0 0.0
    %474 = vmatpush.msra.mxu0 0.0
    %475 = vmatpush.msra.mxu0 0.0
    %476 = vmatpush.msra.mxu0 0.0
    %477 = vmatpush.msra.mxu0 0.0
    %478 = vmatpush.msra.mxu0 0.0
    %479 = vmatpush.msra.mxu0 0.0
    %480 = vmatpush.msra.mxu0 %v288
    %481 = vmatpush.msra.mxu0 %v286
    %482 = vmatpush.msra.mxu0 %v284
    %483 = vmatpush.msra.mxu0 %v282
    %484 = vmatpush.msra.mxu0 %v280
    %485 = vmatpush.msra.mxu0 %v278
    %486 = vmatpush.msra.mxu0 %v276
    %487 = vmatpush.msra.mxu0 %v274
    %488 = vmatmul.f32.gmra.mxu0 %v450
    %v489 = vpop.f32.mrf.mxu0
    %v490 = vadd.f32 0.0, %v489
    %491 = vdwg.mxu0
    %v494 = vrot.slane %v470, 7
    %v495 = vrot.slane %v490, 7
    %v500 = vadd.f32 %v245, %v494
    %v501 = vadd.f32 %v268, %v495
    %v502 = vadd.f32 %v248, %v470
    %v503 = vadd.f32 %v271, %v490
    %v504 = vxor.u32 %v500, 2147483648
    %v505 = vxor.u32 %v502, 2147483648
    %v506 = vmul.f32 %v504, 1.442695
    %v507 = vpow.pop %v506
    %v508 = vmul.f32 %v505, 1.442695
    %v509 = vpow.pop %v508
    %v510 = vadd.f32 %v507, 1.0
    %v511 = vadd.f32 %v509, 1.0
    %v512 = vrcp.pop %v510
    %v513 = vmul.f32 %v510, %v512
    %v514 = vsub.f32 1.0, %v513
    %v515 = vmul.f32 %v512, %v514
    %v516 = vadd.f32 %v512, %v515
    %vm517 = vweird.f32 %v510
    %vm518 = vweird.f32 %v512
    %vm519 = vmor %vm517, %vm518
    %v520 = vsel %vm519, %v512, %v516
    %v521 = vand.u32 2147483647, %v510
    %vm522 = vcmp.eq.f32.partialorder %v521, 8.507059e+37
    %v523 = vand.u32 %v510, 2147483648
    %v524 = vor.u32 1.1754944e-38, %v523
    %v525 = vsel %vm522, %v524, %v520
    %v526 = vmul.f32 1.0, %v525
    %v527 = vrcp.pop %v511
    %v528 = vmul.f32 %v511, %v527
    %v529 = vsub.f32 1.0, %v528
    %v530 = vmul.f32 %v527, %v529
    %v531 = vadd.f32 %v527, %v530
    %vm532 = vweird.f32 %v511
    %vm533 = vweird.f32 %v527
    %vm534 = vmor %vm532, %vm533
    %v535 = vsel %vm534, %v527, %v531
    %v536 = vand.u32 2147483647, %v511
    %vm537 = vcmp.eq.f32.partialorder %v536, 8.507059e+37
    %v538 = vand.u32 %v511, 2147483648
    %v539 = vor.u32 1.1754944e-38, %v538
    %v540 = vsel %vm537, %v539, %v535
    %v541 = vmul.f32 1.0, %v540
    %v542 = vtanh.pop %v501
    %v543 = vtanh.pop %v503
    %v544 = vxor.u32 %v501, 2147483648
    %v545 = vxor.u32 %v503, 2147483648
    %v546 = vmul.f32 %v544, 1.442695
    %v547 = vpow.pop %v546
    %v548 = vmul.f32 %v545, 1.442695
    %v549 = vpow.pop %v548
    %v550 = vadd.f32 %v547, 1.0
    %v551 = vadd.f32 %v549, 1.0
    %v552 = vrcp.pop %v550
    %v553 = vmul.f32 %v550, %v552
    %v554 = vsub.f32 1.0, %v553
    %v555 = vmul.f32 %v552, %v554
    %v556 = vadd.f32 %v552, %v555
    %vm557 = vweird.f32 %v550
    %vm558 = vweird.f32 %v552
    %vm559 = vmor %vm557, %vm558
    %v560 = vsel %vm559, %v552, %v556
    %v561 = vand.u32 2147483647, %v550
    %vm562 = vcmp.eq.f32.partialorder %v561, 8.507059e+37
    %v563 = vand.u32 %v550, 2147483648
    %v564 = vor.u32 1.1754944e-38, %v563
    %v565 = vsel %vm562, %v564, %v560
    %v566 = vmul.f32 1.0, %v565
    %v567 = vrcp.pop %v551
    %v568 = vmul.f32 %v551, %v567
    %v569 = vsub.f32 1.0, %v568
    %v570 = vmul.f32 %v567, %v569
    %v571 = vadd.f32 %v567, %v570
    %vm572 = vweird.f32 %v551
    %vm573 = vweird.f32 %v567
    %vm574 = vmor %vm572, %vm573
    %v575 = vsel %vm574, %v567, %v571
    %v576 = vand.u32 2147483647, %v551
    %vm577 = vcmp.eq.f32.partialorder %v576, 8.507059e+37
    %v578 = vand.u32 %v551, 2147483648
    %v579 = vor.u32 1.1754944e-38, %v578
    %v580 = vsel %vm577, %v579, %v575
    %v581 = vmul.f32 1.0, %v580
    %v584 = vrot.slane %v435, 7
    %v585 = vrot.slane %v436, 7
    %v588 = vmul.f32 %v526, %v584
    %v589 = vmul.f32 %v541, %v585
    %v590 = vmul.f32 %v526, %v542
    %v591 = vmul.f32 %v541, %v543
    %594 = vrot.lane.b32.xlu0 %v590, 64
    %v595 = vpop.permute.xlu0 %594
    %596 = vrot.lane.b32.xlu0 %v591, 64
    %v597 = vpop.permute.xlu0 %596
    %v600 = vadd.f32 %v588, %v595
    %v601 = vadd.f32 %v589, %v597
    %v602 = vtanh.pop %v600
    %v603 = vtanh.pop %v601
    %v604 = vmul.f32 %v566, %v602
    %v605 = vmul.f32 %v581, %v603
    %v608 = vrot.slane %v604, 1
    %v609 = vrot.slane %v605, 1
    %v612 = vadd.f32 %v441, %v608
    %v613 = vadd.f32 %v442, %v609
    %v614 = vsel %vm446, %v605, %v608
    %615 = vrot.lane.b32.xlu0 %v614, 64
    %v616 = vpop.permute.xlu0 %615
    %v617 = vsel %vm289, %v616, 0
    %619 = vmatpush.msra.mxu0 0.0
    %620 = vmatpush.msra.mxu0 0.0
    %621 = vmatpush.msra.mxu0 0.0
    %622 = vmatpush.msra.mxu0 0.0
    %623 = vmatpush.msra.mxu0 0.0
    %624 = vmatpush.msra.mxu0 0.0
    %625 = vmatpush.msra.mxu0 0.0
    %626 = vmatpush.msra.mxu0 0.0
    %627 = vmatpush.msra.mxu0 %v287
    %628 = vmatpush.msra.mxu0 %v285
    %629 = vmatpush.msra.mxu0 %v283
    %630 = vmatpush.msra.mxu0 %v281
    %631 = vmatpush.msra.mxu0 %v279
    %632 = vmatpush.msra.mxu0 %v277
    %633 = vmatpush.msra.mxu0 %v275
    %634 = vmatpush.msra.mxu0 %v273
    %635 = vmatmul.f32.gmra.mxu0 %v617
    %v636 = vpop.f32.mrf.mxu0
    %v637 = vadd.f32 0.0, %v636
    %638 = vdwg.mxu0
    %639 = vmatpush.msra.mxu0 0.0
    %640 = vmatpush.msra.mxu0 0.0
    %641 = vmatpush.msra.mxu0 0.0
    %642 = vmatpush.msra.mxu0 0.0
    %643 = vmatpush.msra.mxu0 0.0
    %644 = vmatpush.msra.mxu0 0.0
    %645 = vmatpush.msra.mxu0 0.0
    %646 = vmatpush.msra.mxu0 0.0
    %647 = vmatpush.msra.mxu0 %v288
    %648 = vmatpush.msra.mxu0 %v286
    %649 = vmatpush.msra.mxu0 %v284
    %650 = vmatpush.msra.mxu0 %v282
    %651 = vmatpush.msra.mxu0 %v280
    %652 = vmatpush.msra.mxu0 %v278
    %653 = vmatpush.msra.mxu0 %v276
    %654 = vmatpush.msra.mxu0 %v274
    %655 = vmatmul.f32.gmra.mxu0 %v617
    %v656 = vpop.f32.mrf.mxu0
    %v657 = vadd.f32 0.0, %v656
    %658 = vdwg.mxu0
    %v661 = vrot.slane %v637, 6
    %v662 = vrot.slane %v657, 6
    %v663 = vrot.slane %v637, 7
    %v664 = vrot.slane %v657, 7
    %v669 = vadd.f32 %v245, %v661
    %v670 = vadd.f32 %v268, %v662
    %v671 = vadd.f32 %v248, %v663
    %v672 = vadd.f32 %v271, %v664
    %v673 = vxor.u32 %v669, 2147483648
    %v674 = vxor.u32 %v671, 2147483648
    %v675 = vmul.f32 %v673, 1.442695
    %v676 = vpow.pop %v675
    %v677 = vmul.f32 %v674, 1.442695
    %v678 = vpow.pop %v677
    %v679 = vadd.f32 %v676, 1.0
    %v680 = vadd.f32 %v678, 1.0
    %v681 = vrcp.pop %v679
    %v682 = vmul.f32 %v679, %v681
    %v683 = vsub.f32 1.0, %v682
    %v684 = vmul.f32 %v681, %v683
    %v685 = vadd.f32 %v681, %v684
    %vm686 = vweird.f32 %v679
    %vm687 = vweird.f32 %v681
    %vm688 = vmor %vm686, %vm687
    %v689 = vsel %vm688, %v681, %v685
    %v690 = vand.u32 2147483647, %v679
    %vm691 = vcmp.eq.f32.partialorder %v690, 8.507059e+37
    %v692 = vand.u32 %v679, 2147483648
    %v693 = vor.u32 1.1754944e-38, %v692
    %v694 = vsel %vm691, %v693, %v689
    %v695 = vmul.f32 1.0, %v694
    %v696 = vrcp.pop %v680
    %v697 = vmul.f32 %v680, %v696
    %v698 = vsub.f32 1.0, %v697
    %v699 = vmul.f32 %v696, %v698
    %v700 = vadd.f32 %v696, %v699
    %vm701 = vweird.f32 %v680
    %vm702 = vweird.f32 %v696
    %vm703 = vmor %vm701, %vm702
    %v704 = vsel %vm703, %v696, %v700
    %v705 = vand.u32 2147483647, %v680
    %vm706 = vcmp.eq.f32.partialorder %v705, 8.507059e+37
    %v707 = vand.u32 %v680, 2147483648
    %v708 = vor.u32 1.1754944e-38, %v707
    %v709 = vsel %vm706, %v708, %v704
    %v710 = vmul.f32 1.0, %v709
    %v711 = vtanh.pop %v670
    %v712 = vtanh.pop %v672
    %v713 = vxor.u32 %v670, 2147483648
    %v714 = vxor.u32 %v672, 2147483648
    %v715 = vmul.f32 %v713, 1.442695
    %v716 = vpow.pop %v715
    %v717 = vmul.f32 %v714, 1.442695
    %v718 = vpow.pop %v717
    %v719 = vadd.f32 %v716, 1.0
    %v720 = vadd.f32 %v718, 1.0
    %v721 = vrcp.pop %v719
    %v722 = vmul.f32 %v719, %v721
    %v723 = vsub.f32 1.0, %v722
    %v724 = vmul.f32 %v721, %v723
    %v725 = vadd.f32 %v721, %v724
    %vm726 = vweird.f32 %v719
    %vm727 = vweird.f32 %v721
    %vm728 = vmor %vm726, %vm727
    %v729 = vsel %vm728, %v721, %v725
    %v730 = vand.u32 2147483647, %v719
    %vm731 = vcmp.eq.f32.partialorder %v730, 8.507059e+37
    %v732 = vand.u32 %v719, 2147483648
    %v733 = vor.u32 1.1754944e-38, %v732
    %v734 = vsel %vm731, %v733, %v729
    %v735 = vmul.f32 1.0, %v734
    %v736 = vrcp.pop %v720
    %v737 = vmul.f32 %v720, %v736
    %v738 = vsub.f32 1.0, %v737
    %v739 = vmul.f32 %v736, %v738
    %v740 = vadd.f32 %v736, %v739
    %vm741 = vweird.f32 %v720
    %vm742 = vweird.f32 %v736
    %vm743 = vmor %vm741, %vm742
    %v744 = vsel %vm743, %v736, %v740
    %v745 = vand.u32 2147483647, %v720
    %vm746 = vcmp.eq.f32.partialorder %v745, 8.507059e+37
    %v747 = vand.u32 %v720, 2147483648
    %v748 = vor.u32 1.1754944e-38, %v747
    %v749 = vsel %vm746, %v748, %v744
    %v750 = vmul.f32 1.0, %v749
    %v753 = vrot.slane %v600, 7
    %v754 = vrot.slane %v601, 7
    %v757 = vmul.f32 %v695, %v753
    %v758 = vmul.f32 %v710, %v754
    %v759 = vmul.f32 %v695, %v711
    %v760 = vmul.f32 %v710, %v712
    %763 = vrot.lane.b32.xlu0 %v759, 64
    %v764 = vpop.permute.xlu0 %763
    %765 = vrot.lane.b32.xlu0 %v760, 64
    %v766 = vpop.permute.xlu0 %765
    %v769 = vadd.f32 %v757, %v764
    %v770 = vadd.f32 %v758, %v766
    %v771 = vtanh.pop %v769
    %v772 = vtanh.pop %v770
    %v773 = vmul.f32 %v735, %v771
    %v774 = vmul.f32 %v750, %v772
    %v777 = vrot.slane %v773, 2
    %v778 = vrot.slane %v774, 2
    %v781 = vadd.f32 %v612, %v777
    %v782 = vadd.f32 %v613, %v778
    %v783 = vrot.slane %v774, 1
    %v784 = vsel %vm446, %v783, %v777
    %785 = vrot.lane.b32.xlu0 %v784, 64
    %v786 = vpop.permute.xlu0 %785
    %v787 = vsel %vm289, %v786, 0
    %789 = vmatpush.msra.mxu0 0.0
    %790 = vmatpush.msra.mxu0 0.0
    %791 = vmatpush.msra.mxu0 0.0
    %792 = vmatpush.msra.mxu0 0.0
    %793 = vmatpush.msra.mxu0 0.0
    %794 = vmatpush.msra.mxu0 0.0
    %795 = vmatpush.msra.mxu0 0.0
    %796 = vmatpush.msra.mxu0 0.0
    %797 = vmatpush.msra.mxu0 %v287
    %798 = vmatpush.msra.mxu0 %v285
    %799 = vmatpush.msra.mxu0 %v283
    %800 = vmatpush.msra.mxu0 %v281
    %801 = vmatpush.msra.mxu0 %v279
    %802 = vmatpush.msra.mxu0 %v277
    %803 = vmatpush.msra.mxu0 %v275
    %804 = vmatpush.msra.mxu0 %v273
    %805 = vmatmul.f32.gmra.mxu0 %v787
    %v806 = vpop.f32.mrf.mxu0
    %v807 = vadd.f32 0.0, %v806
    %808 = vdwg.mxu0
    %809 = vmatpush.msra.mxu0 0.0
    %810 = vmatpush.msra.mxu0 0.0
    %811 = vmatpush.msra.mxu0 0.0
    %812 = vmatpush.msra.mxu0 0.0
    %813 = vmatpush.msra.mxu0 0.0
    %814 = vmatpush.msra.mxu0 0.0
    %815 = vmatpush.msra.mxu0 0.0
    %816 = vmatpush.msra.mxu0 0.0
    %817 = vmatpush.msra.mxu0 %v288
    %818 = vmatpush.msra.mxu0 %v286
    %819 = vmatpush.msra.mxu0 %v284
    %820 = vmatpush.msra.mxu0 %v282
    %821 = vmatpush.msra.mxu0 %v280
    %822 = vmatpush.msra.mxu0 %v278
    %823 = vmatpush.msra.mxu0 %v276
    %824 = vmatpush.msra.mxu0 %v274
    %825 = vmatmul.f32.gmra.mxu0 %v787
    %v826 = vpop.f32.mrf.mxu0
    %v827 = vadd.f32 0.0, %v826
    %828 = vdwg.mxu0
    %v831 = vrot.slane %v807, 5
    %v832 = vrot.slane %v827, 5
    %v833 = vrot.slane %v807, 6
    %v834 = vrot.slane %v827, 6
    %v839 = vadd.f32 %v245, %v831
    %v840 = vadd.f32 %v268, %v832
    %v841 = vadd.f32 %v248, %v833
    %v842 = vadd.f32 %v271, %v834
    %v843 = vxor.u32 %v839, 2147483648
    %v844 = vxor.u32 %v841, 2147483648
    %v845 = vmul.f32 %v843, 1.442695
    %v846 = vpow.pop %v845
    %v847 = vmul.f32 %v844, 1.442695
    %v848 = vpow.pop %v847
    %v849 = vadd.f32 %v846, 1.0
    %v850 = vadd.f32 %v848, 1.0
    %v851 = vrcp.pop %v849
    %v852 = vmul.f32 %v849, %v851
    %v853 = vsub.f32 1.0, %v852
    %v854 = vmul.f32 %v851, %v853
    %v855 = vadd.f32 %v851, %v854
    %vm856 = vweird.f32 %v849
    %vm857 = vweird.f32 %v851
    %vm858 = vmor %vm856, %vm857
    %v859 = vsel %vm858, %v851, %v855
    %v860 = vand.u32 2147483647, %v849
    %vm861 = vcmp.eq.f32.partialorder %v860, 8.507059e+37
    %v862 = vand.u32 %v849, 2147483648
    %v863 = vor.u32 1.1754944e-38, %v862
    %v864 = vsel %vm861, %v863, %v859
    %v865 = vmul.f32 1.0, %v864
    %v866 = vrcp.pop %v850
    %v867 = vmul.f32 %v850, %v866
    %v868 = vsub.f32 1.0, %v867
    %v869 = vmul.f32 %v866, %v868
    %v870 = vadd.f32 %v866, %v869
    %vm871 = vweird.f32 %v850
    %vm872 = vweird.f32 %v866
    %vm873 = vmor %vm871, %vm872
    %v874 = vsel %vm873, %v866, %v870
    %v875 = vand.u32 2147483647, %v850
    %vm876 = vcmp.eq.f32.partialorder %v875, 8.507059e+37
    %v877 = vand.u32 %v850, 2147483648
    %v878 = vor.u32 1.1754944e-38, %v877
    %v879 = vsel %vm876, %v878, %v874
    %v880 = vmul.f32 1.0, %v879
    %v881 = vtanh.pop %v840
    %v882 = vtanh.pop %v842
    %v883 = vxor.u32 %v840, 2147483648
    %v884 = vxor.u32 %v842, 2147483648
    %v885 = vmul.f32 %v883, 1.442695
    %v886 = vpow.pop %v885
    %v887 = vmul.f32 %v884, 1.442695
    %v888 = vpow.pop %v887
    %v889 = vadd.f32 %v886, 1.0
    %v890 = vadd.f32 %v888, 1.0
    %v891 = vrcp.pop %v889
    %v892 = vmul.f32 %v889, %v891
    %v893 = vsub.f32 1.0, %v892
    %v894 = vmul.f32 %v891, %v893
    %v895 = vadd.f32 %v891, %v894
    %vm896 = vweird.f32 %v889
    %vm897 = vweird.f32 %v891
    %vm898 = vmor %vm896, %vm897
    %v899 = vsel %vm898, %v891, %v895
    %v900 = vand.u32 2147483647, %v889
    %vm901 = vcmp.eq.f32.partialorder %v900, 8.507059e+37
    %v902 = vand.u32 %v889, 2147483648
    %v903 = vor.u32 1.1754944e-38, %v902
    %v904 = vsel %vm901, %v903, %v899
    %v905 = vmul.f32 1.0, %v904
    %v906 = vrcp.pop %v890
    %v907 = vmul.f32 %v890, %v906
    %v908 = vsub.f32 1.0, %v907
    %v909 = vmul.f32 %v906, %v908
    %v910 = vadd.f32 %v906, %v909
    %vm911 = vweird.f32 %v890
    %vm912 = vweird.f32 %v906
    %vm913 = vmor %vm911, %vm912
    %v914 = vsel %vm913, %v906, %v910
    %v915 = vand.u32 2147483647, %v890
    %vm916 = vcmp.eq.f32.partialorder %v915, 8.507059e+37
    %v917 = vand.u32 %v890, 2147483648
    %v918 = vor.u32 1.1754944e-38, %v917
    %v919 = vsel %vm916, %v918, %v914
    %v920 = vmul.f32 1.0, %v919
    %v923 = vrot.slane %v769, 7
    %v924 = vrot.slane %v770, 7
    %v927 = vmul.f32 %v865, %v923
    %v928 = vmul.f32 %v880, %v924
    %v929 = vmul.f32 %v865, %v881
    %v930 = vmul.f32 %v880, %v882
    %933 = vrot.lane.b32.xlu0 %v929, 64
    %v934 = vpop.permute.xlu0 %933
    %935 = vrot.lane.b32.xlu0 %v930, 64
    %v936 = vpop.permute.xlu0 %935
    %v939 = vadd.f32 %v927, %v934
    %v940 = vadd.f32 %v928, %v936
    %v941 = vtanh.pop %v939
    %v942 = vtanh.pop %v940
    %v943 = vmul.f32 %v905, %v941
    %v944 = vmul.f32 %v920, %v942
    %v947 = vrot.slane %v943, 3
    %v948 = vrot.slane %v944, 3
    %v951 = vadd.f32 %v781, %v947
    %v952 = vadd.f32 %v782, %v948
    %v953 = vrot.slane %v944, 2
    %v954 = vsel %vm446, %v953, %v947
    %955 = vrot.lane.b32.xlu0 %v954, 64
    %v956 = vpop.permute.xlu0 %955
    %v957 = vsel %vm289, %v956, 0
    %959 = vmatpush.msra.mxu0 0.0
    %960 = vmatpush.msra.mxu0 0.0
    %961 = vmatpush.msra.mxu0 0.0
    %962 = vmatpush.msra.mxu0 0.0
    %963 = vmatpush.msra.mxu0 0.0
    %964 = vmatpush.msra.mxu0 0.0
    %965 = vmatpush.msra.mxu0 0.0
    %966 = vmatpush.msra.mxu0 0.0
    %967 = vmatpush.msra.mxu0 %v287
    %968 = vmatpush.msra.mxu0 %v285
    %969 = vmatpush.msra.mxu0 %v283
    %970 = vmatpush.msra.mxu0 %v281
    %971 = vmatpush.msra.mxu0 %v279
    %972 = vmatpush.msra.mxu0 %v277
    %973 = vmatpush.msra.mxu0 %v275
    %974 = vmatpush.msra.mxu0 %v273
    %975 = vmatmul.f32.gmra.mxu0 %v957
    %v976 = vpop.f32.mrf.mxu0
    %v977 = vadd.f32 0.0, %v976
    %978 = vdwg.mxu0
    %979 = vmatpush.msra.mxu0 0.0
    %980 = vmatpush.msra.mxu0 0.0
    %981 = vmatpush.msra.mxu0 0.0
    %982 = vmatpush.msra.mxu0 0.0
    %983 = vmatpush.msra.mxu0 0.0
    %984 = vmatpush.msra.mxu0 0.0
    %985 = vmatpush.msra.mxu0 0.0
    %986 = vmatpush.msra.mxu0 0.0
    %987 = vmatpush.msra.mxu0 %v288
    %988 = vmatpush.msra.mxu0 %v286
    %989 = vmatpush.msra.mxu0 %v284
    %990 = vmatpush.msra.mxu0 %v282
    %991 = vmatpush.msra.mxu0 %v280
    %992 = vmatpush.msra.mxu0 %v278
    %993 = vmatpush.msra.mxu0 %v276
    %994 = vmatpush.msra.mxu0 %v274
    %995 = vmatmul.f32.gmra.mxu0 %v957
    %v996 = vpop.f32.mrf.mxu0
    %v997 = vadd.f32 0.0, %v996
    %998 = vdwg.mxu0
    %v1001 = vrot.slane %v977, 4
    %v1002 = vrot.slane %v997, 4
    %v1003 = vrot.slane %v977, 5
    %v1004 = vrot.slane %v997, 5
    %v1009 = vadd.f32 %v245, %v1001
    %v1010 = vadd.f32 %v268, %v1002
    %v1011 = vadd.f32 %v248, %v1003
    %v1012 = vadd.f32 %v271, %v1004
    %v1013 = vxor.u32 %v1009, 2147483648
    %v1014 = vxor.u32 %v1011, 2147483648
    %v1015 = vmul.f32 %v1013, 1.442695
    %v1016 = vpow.pop %v1015
    %v1017 = vmul.f32 %v1014, 1.442695
    %v1018 = vpow.pop %v1017
    %v1019 = vadd.f32 %v1016, 1.0
    %v1020 = vadd.f32 %v1018, 1.0
    %v1021 = vrcp.pop %v1019
    %v1022 = vmul.f32 %v1019, %v1021
    %v1023 = vsub.f32 1.0, %v1022
    %v1024 = vmul.f32 %v1021, %v1023
    %v1025 = vadd.f32 %v1021, %v1024
    %vm1026 = vweird.f32 %v1019
    %vm1027 = vweird.f32 %v1021
    %vm1028 = vmor %vm1026, %vm1027
    %v1029 = vsel %vm1028, %v1021, %v1025
    %v1030 = vand.u32 2147483647, %v1019
    %vm1031 = vcmp.eq.f32.partialorder %v1030, 8.507059e+37
    %v1032 = vand.u32 %v1019, 2147483648
    %v1033 = vor.u32 1.1754944e-38, %v1032
    %v1034 = vsel %vm1031, %v1033, %v1029
    %v1035 = vmul.f32 1.0, %v1034
    %v1036 = vrcp.pop %v1020
    %v1037 = vmul.f32 %v1020, %v1036
    %v1038 = vsub.f32 1.0, %v1037
    %v1039 = vmul.f32 %v1036, %v1038
    %v1040 = vadd.f32 %v1036, %v1039
    %vm1041 = vweird.f32 %v1020
    %vm1042 = vweird.f32 %v1036
    %vm1043 = vmor %vm1041, %vm1042
    %v1044 = vsel %vm1043, %v1036, %v1040
    %v1045 = vand.u32 2147483647, %v1020
    %vm1046 = vcmp.eq.f32.partialorder %v1045, 8.507059e+37
    %v1047 = vand.u32 %v1020, 2147483648
    %v1048 = vor.u32 1.1754944e-38, %v1047
    %v1049 = vsel %vm1046, %v1048, %v1044
    %v1050 = vmul.f32 1.0, %v1049
    %v1051 = vtanh.pop %v1010
    %v1052 = vtanh.pop %v1012
    %v1053 = vxor.u32 %v1010, 2147483648
    %v1054 = vxor.u32 %v1012, 2147483648
    %v1055 = vmul.f32 %v1053, 1.442695
    %v1056 = vpow.pop %v1055
    %v1057 = vmul.f32 %v1054, 1.442695
    %v1058 = vpow.pop %v1057
    %v1059 = vadd.f32 %v1056, 1.0
    %v1060 = vadd.f32 %v1058, 1.0
    %v1061 = vrcp.pop %v1059
    %v1062 = vmul.f32 %v1059, %v1061
    %v1063 = vsub.f32 1.0, %v1062
    %v1064 = vmul.f32 %v1061, %v1063
    %v1065 = vadd.f32 %v1061, %v1064
    %vm1066 = vweird.f32 %v1059
    %vm1067 = vweird.f32 %v1061
    %vm1068 = vmor %vm1066, %vm1067
    %v1069 = vsel %vm1068, %v1061, %v1065
    %v1070 = vand.u32 2147483647, %v1059
    %vm1071 = vcmp.eq.f32.partialorder %v1070, 8.507059e+37
    %v1072 = vand.u32 %v1059, 2147483648
    %v1073 = vor.u32 1.1754944e-38, %v1072
    %v1074 = vsel %vm1071, %v1073, %v1069
    %v1075 = vmul.f32 1.0, %v1074
    %v1076 = vrcp.pop %v1060
    %v1077 = vmul.f32 %v1060, %v1076
    %v1078 = vsub.f32 1.0, %v1077
    %v1079 = vmul.f32 %v1076, %v1078
    %v1080 = vadd.f32 %v1076, %v1079
    %vm1081 = vweird.f32 %v1060
    %vm1082 = vweird.f32 %v1076
    %vm1083 = vmor %vm1081, %vm1082
    %v1084 = vsel %vm1083, %v1076, %v1080
    %v1085 = vand.u32 2147483647, %v1060
    %vm1086 = vcmp.eq.f32.partialorder %v1085, 8.507059e+37
    %v1087 = vand.u32 %v1060, 2147483648
    %v1088 = vor.u32 1.1754944e-38, %v1087
    %v1089 = vsel %vm1086, %v1088, %v1084
    %v1090 = vmul.f32 1.0, %v1089
    %v1093 = vrot.slane %v939, 7
    %v1094 = vrot.slane %v940, 7
    %v1097 = vmul.f32 %v1035, %v1093
    %v1098 = vmul.f32 %v1050, %v1094
    %v1099 = vmul.f32 %v1035, %v1051
    %v1100 = vmul.f32 %v1050, %v1052
    %1103 = vrot.lane.b32.xlu0 %v1099, 64
    %v1104 = vpop.permute.xlu0 %1103
    %1105 = vrot.lane.b32.xlu0 %v1100, 64
    %v1106 = vpop.permute.xlu0 %1105
    %v1109 = vadd.f32 %v1097, %v1104
    %v1110 = vadd.f32 %v1098, %v1106
    %v1111 = vtanh.pop %v1109
    %v1112 = vtanh.pop %v1110
    %v1113 = vmul.f32 %v1075, %v1111
    %v1114 = vmul.f32 %v1090, %v1112
    %v1117 = vrot.slane %v1113, 4
    %v1118 = vrot.slane %v1114, 4
    %v1121 = vadd.f32 %v951, %v1117
    %v1122 = vadd.f32 %v952, %v1118
    %v1123 = vrot.slane %v1114, 3
    %v1124 = vsel %vm446, %v1123, %v1117
    %1125 = vrot.lane.b32.xlu0 %v1124, 64
    %v1126 = vpop.permute.xlu0 %1125
    %v1127 = vsel %vm289, %v1126, 0
    %1129 = vmatpush.msra.mxu0 0.0
    %1130 = vmatpush.msra.mxu0 0.0
    %1131 = vmatpush.msra.mxu0 0.0
    %1132 = vmatpush.msra.mxu0 0.0
    %1133 = vmatpush.msra.mxu0 0.0
    %1134 = vmatpush.msra.mxu0 0.0
    %1135 = vmatpush.msra.mxu0 0.0
    %1136 = vmatpush.msra.mxu0 0.0
    %1137 = vmatpush.msra.mxu0 %v287
    %1138 = vmatpush.msra.mxu0 %v285
    %1139 = vmatpush.msra.mxu0 %v283
    %1140 = vmatpush.msra.mxu0 %v281
    %1141 = vmatpush.msra.mxu0 %v279
    %1142 = vmatpush.msra.mxu0 %v277
    %1143 = vmatpush.msra.mxu0 %v275
    %1144 = vmatpush.msra.mxu0 %v273
    %1145 = vmatmul.f32.gmra.mxu0 %v1127
    %v1146 = vpop.f32.mrf.mxu0
    %v1147 = vadd.f32 0.0, %v1146
    %1148 = vdwg.mxu0
    %1149 = vmatpush.msra.mxu0 0.0
    %1150 = vmatpush.msra.mxu0 0.0
    %1151 = vmatpush.msra.mxu0 0.0
    %1152 = vmatpush.msra.mxu0 0.0
    %1153 = vmatpush.msra.mxu0 0.0
    %1154 = vmatpush.msra.mxu0 0.0
    %1155 = vmatpush.msra.mxu0 0.0
    %1156 = vmatpush.msra.mxu0 0.0
    %1157 = vmatpush.msra.mxu0 %v288
    %1158 = vmatpush.msra.mxu0 %v286
    %1159 = vmatpush.msra.mxu0 %v284
    %1160 = vmatpush.msra.mxu0 %v282
    %1161 = vmatpush.msra.mxu0 %v280
    %1162 = vmatpush.msra.mxu0 %v278
    %1163 = vmatpush.msra.mxu0 %v276
    %1164 = vmatpush.msra.mxu0 %v274
    %1165 = vmatmul.f32.gmra.mxu0 %v1127
    %v1166 = vpop.f32.mrf.mxu0
    %v1167 = vadd.f32 0.0, %v1166
    %1168 = vdwg.mxu0
    %v1171 = vrot.slane %v1147, 3
    %v1172 = vrot.slane %v1167, 3
    %v1173 = vrot.slane %v1147, 4
    %v1174 = vrot.slane %v1167, 4
    %v1179 = vadd.f32 %v245, %v1171
    %v1180 = vadd.f32 %v268, %v1172
    %v1181 = vadd.f32 %v248, %v1173
    %v1182 = vadd.f32 %v271, %v1174
    %v1183 = vxor.u32 %v1179, 2147483648
    %v1184 = vxor.u32 %v1181, 2147483648
    %v1185 = vmul.f32 %v1183, 1.442695
    %v1186 = vpow.pop %v1185
    %v1187 = vmul.f32 %v1184, 1.442695
    %v1188 = vpow.pop %v1187
    %v1189 = vadd.f32 %v1186, 1.0
    %v1190 = vadd.f32 %v1188, 1.0
    %v1191 = vrcp.pop %v1189
    %v1192 = vmul.f32 %v1189, %v1191
    %v1193 = vsub.f32 1.0, %v1192
    %v1194 = vmul.f32 %v1191, %v1193
    %v1195 = vadd.f32 %v1191, %v1194
    %vm1196 = vweird.f32 %v1189
    %vm1197 = vweird.f32 %v1191
    %vm1198 = vmor %vm1196, %vm1197
    %v1199 = vsel %vm1198, %v1191, %v1195
    %v1200 = vand.u32 2147483647, %v1189
    %vm1201 = vcmp.eq.f32.partialorder %v1200, 8.507059e+37
    %v1202 = vand.u32 %v1189, 2147483648
    %v1203 = vor.u32 1.1754944e-38, %v1202
    %v1204 = vsel %vm1201, %v1203, %v1199
    %v1205 = vmul.f32 1.0, %v1204
    %v1206 = vrcp.pop %v1190
    %v1207 = vmul.f32 %v1190, %v1206
    %v1208 = vsub.f32 1.0, %v1207
    %v1209 = vmul.f32 %v1206, %v1208
    %v1210 = vadd.f32 %v1206, %v1209
    %vm1211 = vweird.f32 %v1190
    %vm1212 = vweird.f32 %v1206
    %vm1213 = vmor %vm1211, %vm1212
    %v1214 = vsel %vm1213, %v1206, %v1210
    %v1215 = vand.u32 2147483647, %v1190
    %vm1216 = vcmp.eq.f32.partialorder %v1215, 8.507059e+37
    %v1217 = vand.u32 %v1190, 2147483648
    %v1218 = vor.u32 1.1754944e-38, %v1217
    %v1219 = vsel %vm1216, %v1218, %v1214
    %v1220 = vmul.f32 1.0, %v1219
    %v1221 = vtanh.pop %v1180
    %v1222 = vtanh.pop %v1182
    %v1223 = vxor.u32 %v1180, 2147483648
    %v1224 = vxor.u32 %v1182, 2147483648
    %v1225 = vmul.f32 %v1223, 1.442695
    %v1226 = vpow.pop %v1225
    %v1227 = vmul.f32 %v1224, 1.442695
    %v1228 = vpow.pop %v1227
    %v1229 = vadd.f32 %v1226, 1.0
    %v1230 = vadd.f32 %v1228, 1.0
    %v1231 = vrcp.pop %v1229
    %v1232 = vmul.f32 %v1229, %v1231
    %v1233 = vsub.f32 1.0, %v1232
    %v1234 = vmul.f32 %v1231, %v1233
    %v1235 = vadd.f32 %v1231, %v1234
    %vm1236 = vweird.f32 %v1229
    %vm1237 = vweird.f32 %v1231
    %vm1238 = vmor %vm1236, %vm1237
    %v1239 = vsel %vm1238, %v1231, %v1235
    %v1240 = vand.u32 2147483647, %v1229
    %vm1241 = vcmp.eq.f32.partialorder %v1240, 8.507059e+37
    %v1242 = vand.u32 %v1229, 2147483648
    %v1243 = vor.u32 1.1754944e-38, %v1242
    %v1244 = vsel %vm1241, %v1243, %v1239
    %v1245 = vmul.f32 1.0, %v1244
    %v1246 = vrcp.pop %v1230
    %v1247 = vmul.f32 %v1230, %v1246
    %v1248 = vsub.f32 1.0, %v1247
    %v1249 = vmul.f32 %v1246, %v1248
    %v1250 = vadd.f32 %v1246, %v1249
    %vm1251 = vweird.f32 %v1230
    %vm1252 = vweird.f32 %v1246
    %vm1253 = vmor %vm1251, %vm1252
    %v1254 = vsel %vm1253, %v1246, %v1250
    %v1255 = vand.u32 2147483647, %v1230
    %vm1256 = vcmp.eq.f32.partialorder %v1255, 8.507059e+37
    %v1257 = vand.u32 %v1230, 2147483648
    %v1258 = vor.u32 1.1754944e-38, %v1257
    %v1259 = vsel %vm1256, %v1258, %v1254
    %v1260 = vmul.f32 1.0, %v1259
    %v1263 = vrot.slane %v1109, 7
    %v1264 = vrot.slane %v1110, 7
    %v1267 = vmul.f32 %v1205, %v1263
    %v1268 = vmul.f32 %v1220, %v1264
    %v1269 = vmul.f32 %v1205, %v1221
    %v1270 = vmul.f32 %v1220, %v1222
    %1273 = vrot.lane.b32.xlu0 %v1269, 64
    %v1274 = vpop.permute.xlu0 %1273
    %1275 = vrot.lane.b32.xlu0 %v1270, 64
    %v1276 = vpop.permute.xlu0 %1275
    %v1279 = vadd.f32 %v1267, %v1274
    %v1280 = vadd.f32 %v1268, %v1276
    %v1281 = vtanh.pop %v1279
    %v1282 = vtanh.pop %v1280
    %v1283 = vmul.f32 %v1245, %v1281
    %v1284 = vmul.f32 %v1260, %v1282
    %v1287 = vrot.slane %v1283, 5
    %v1288 = vrot.slane %v1284, 5
    %v1291 = vadd.f32 %v1121, %v1287
    %v1292 = vadd.f32 %v1122, %v1288
    %v1293 = vrot.slane %v1284, 4
    %v1294 = vsel %vm446, %v1293, %v1287
    %1295 = vrot.lane.b32.xlu0 %v1294, 64
    %v1296 = vpop.permute.xlu0 %1295
    %v1297 = vsel %vm289, %v1296, 0
    %1299 = vmatpush.msra.mxu0 0.0
    %1300 = vmatpush.msra.mxu0 0.0
    %1301 = vmatpush.msra.mxu0 0.0
    %1302 = vmatpush.msra.mxu0 0.0
    %1303 = vmatpush.msra.mxu0 0.0
    %1304 = vmatpush.msra.mxu0 0.0
    %1305 = vmatpush.msra.mxu0 0.0
    %1306 = vmatpush.msra.mxu0 0.0
    %1307 = vmatpush.msra.mxu0 %v287
    %1308 = vmatpush.msra.mxu0 %v285
    %1309 = vmatpush.msra.mxu0 %v283
    %1310 = vmatpush.msra.mxu0 %v281
    %1311 = vmatpush.msra.mxu0 %v279
    %1312 = vmatpush.msra.mxu0 %v277
    %1313 = vmatpush.msra.mxu0 %v275
    %1314 = vmatpush.msra.mxu0 %v273
    %1315 = vmatmul.f32.gmra.mxu0 %v1297
    %v1316 = vpop.f32.mrf.mxu0
    %v1317 = vadd.f32 0.0, %v1316
    %1318 = vdwg.mxu0
    %1319 = vmatpush.msra.mxu0 0.0
    %1320 = vmatpush.msra.mxu0 0.0
    %1321 = vmatpush.msra.mxu0 0.0
    %1322 = vmatpush.msra.mxu0 0.0
    %1323 = vmatpush.msra.mxu0 0.0
    %1324 = vmatpush.msra.mxu0 0.0
    %1325 = vmatpush.msra.mxu0 0.0
    %1326 = vmatpush.msra.mxu0 0.0
    %1327 = vmatpush.msra.mxu0 %v288
    %1328 = vmatpush.msra.mxu0 %v286
    %1329 = vmatpush.msra.mxu0 %v284
    %1330 = vmatpush.msra.mxu0 %v282
    %1331 = vmatpush.msra.mxu0 %v280
    %1332 = vmatpush.msra.mxu0 %v278
    %1333 = vmatpush.msra.mxu0 %v276
    %1334 = vmatpush.msra.mxu0 %v274
    %1335 = vmatmul.f32.gmra.mxu0 %v1297
    %v1336 = vpop.f32.mrf.mxu0
    %v1337 = vadd.f32 0.0, %v1336
    %1338 = vdwg.mxu0
    %v1341 = vrot.slane %v1317, 2
    %v1342 = vrot.slane %v1337, 2
    %v1343 = vrot.slane %v1317, 3
    %v1344 = vrot.slane %v1337, 3
    %v1349 = vadd.f32 %v245, %v1341
    %v1350 = vadd.f32 %v268, %v1342
    %v1351 = vadd.f32 %v248, %v1343
    %v1352 = vadd.f32 %v271, %v1344
    %v1353 = vxor.u32 %v1349, 2147483648
    %v1354 = vxor.u32 %v1351, 2147483648
    %v1355 = vmul.f32 %v1353, 1.442695
    %v1356 = vpow.pop %v1355
    %v1357 = vmul.f32 %v1354, 1.442695
    %v1358 = vpow.pop %v1357
    %v1359 = vadd.f32 %v1356, 1.0
    %v1360 = vadd.f32 %v1358, 1.0
    %v1361 = vrcp.pop %v1359
    %v1362 = vmul.f32 %v1359, %v1361
    %v1363 = vsub.f32 1.0, %v1362
    %v1364 = vmul.f32 %v1361, %v1363
    %v1365 = vadd.f32 %v1361, %v1364
    %vm1366 = vweird.f32 %v1359
    %vm1367 = vweird.f32 %v1361
    %vm1368 = vmor %vm1366, %vm1367
    %v1369 = vsel %vm1368, %v1361, %v1365
    %v1370 = vand.u32 2147483647, %v1359
    %vm1371 = vcmp.eq.f32.partialorder %v1370, 8.507059e+37
    %v1372 = vand.u32 %v1359, 2147483648
    %v1373 = vor.u32 1.1754944e-38, %v1372
    %v1374 = vsel %vm1371, %v1373, %v1369
    %v1375 = vmul.f32 1.0, %v1374
    %v1376 = vrcp.pop %v1360
    %v1377 = vmul.f32 %v1360, %v1376
    %v1378 = vsub.f32 1.0, %v1377
    %v1379 = vmul.f32 %v1376, %v1378
    %v1380 = vadd.f32 %v1376, %v1379
    %vm1381 = vweird.f32 %v1360
    %vm1382 = vweird.f32 %v1376
    %vm1383 = vmor %vm1381, %vm1382
    %v1384 = vsel %vm1383, %v1376, %v1380
    %v1385 = vand.u32 2147483647, %v1360
    %vm1386 = vcmp.eq.f32.partialorder %v1385, 8.507059e+37
    %v1387 = vand.u32 %v1360, 2147483648
    %v1388 = vor.u32 1.1754944e-38, %v1387
    %v1389 = vsel %vm1386, %v1388, %v1384
    %v1390 = vmul.f32 1.0, %v1389
    %v1391 = vtanh.pop %v1350
    %v1392 = vtanh.pop %v1352
    %v1393 = vxor.u32 %v1350, 2147483648
    %v1394 = vxor.u32 %v1352, 2147483648
    %v1395 = vmul.f32 %v1393, 1.442695
    %v1396 = vpow.pop %v1395
    %v1397 = vmul.f32 %v1394, 1.442695
    %v1398 = vpow.pop %v1397
    %v1399 = vadd.f32 %v1396, 1.0
    %v1400 = vadd.f32 %v1398, 1.0
    %v1401 = vrcp.pop %v1399
    %v1402 = vmul.f32 %v1399, %v1401
    %v1403 = vsub.f32 1.0, %v1402
    %v1404 = vmul.f32 %v1401, %v1403
    %v1405 = vadd.f32 %v1401, %v1404
    %vm1406 = vweird.f32 %v1399
    %vm1407 = vweird.f32 %v1401
    %vm1408 = vmor %vm1406, %vm1407
    %v1409 = vsel %vm1408, %v1401, %v1405
    %v1410 = vand.u32 2147483647, %v1399
    %vm1411 = vcmp.eq.f32.partialorder %v1410, 8.507059e+37
    %v1412 = vand.u32 %v1399, 2147483648
    %v1413 = vor.u32 1.1754944e-38, %v1412
    %v1414 = vsel %vm1411, %v1413, %v1409
    %v1415 = vmul.f32 1.0, %v1414
    %v1416 = vrcp.pop %v1400
    %v1417 = vmul.f32 %v1400, %v1416
    %v1418 = vsub.f32 1.0, %v1417
    %v1419 = vmul.f32 %v1416, %v1418
    %v1420 = vadd.f32 %v1416, %v1419
    %vm1421 = vweird.f32 %v1400
    %vm1422 = vweird.f32 %v1416
    %vm1423 = vmor %vm1421, %vm1422
    %v1424 = vsel %vm1423, %v1416, %v1420
    %v1425 = vand.u32 2147483647, %v1400
    %vm1426 = vcmp.eq.f32.partialorder %v1425, 8.507059e+37
    %v1427 = vand.u32 %v1400, 2147483648
    %v1428 = vor.u32 1.1754944e-38, %v1427
    %v1429 = vsel %vm1426, %v1428, %v1424
    %v1430 = vmul.f32 1.0, %v1429
    %v1433 = vrot.slane %v1279, 7
    %v1434 = vrot.slane %v1280, 7
    %v1437 = vmul.f32 %v1375, %v1433
    %v1438 = vmul.f32 %v1390, %v1434
    %v1439 = vmul.f32 %v1375, %v1391
    %v1440 = vmul.f32 %v1390, %v1392
    %1443 = vrot.lane.b32.xlu0 %v1439, 64
    %v1444 = vpop.permute.xlu0 %1443
    %1445 = vrot.lane.b32.xlu0 %v1440, 64
    %v1446 = vpop.permute.xlu0 %1445
    %v1449 = vadd.f32 %v1437, %v1444
    %v1450 = vadd.f32 %v1438, %v1446
    %v1451 = vtanh.pop %v1449
    %v1452 = vtanh.pop %v1450
    %v1453 = vmul.f32 %v1415, %v1451
    %v1454 = vmul.f32 %v1430, %v1452
    %v1457 = vrot.slane %v1453, 6
    %v1458 = vrot.slane %v1454, 6
    %v1461 = vadd.f32 %v1291, %v1457
    %v1462 = vadd.f32 %v1292, %v1458
    %v1463 = vrot.slane %v1454, 5
    %v1464 = vsel %vm446, %v1463, %v1457
    %1465 = vrot.lane.b32.xlu0 %v1464, 64
    %v1466 = vpop.permute.xlu0 %1465
    %v1467 = vsel %vm289, %v1466, 0
    %1469 = vmatpush.msra.mxu0 0.0
    %1470 = vmatpush.msra.mxu0 0.0
    %1471 = vmatpush.msra.mxu0 0.0
    %1472 = vmatpush.msra.mxu0 0.0
    %1473 = vmatpush.msra.mxu0 0.0
    %1474 = vmatpush.msra.mxu0 0.0
    %1475 = vmatpush.msra.mxu0 0.0
    %1476 = vmatpush.msra.mxu0 0.0
    %1477 = vmatpush.msra.mxu0 %v287
    %1478 = vmatpush.msra.mxu0 %v285
    %1479 = vmatpush.msra.mxu0 %v283
    %1480 = vmatpush.msra.mxu0 %v281
    %1481 = vmatpush.msra.mxu0 %v279
    %1482 = vmatpush.msra.mxu0 %v277
    %1483 = vmatpush.msra.mxu0 %v275
    %1484 = vmatpush.msra.mxu0 %v273
    %1485 = vmatmul.f32.gmra.mxu0 %v1467
    %v1486 = vpop.f32.mrf.mxu0
    %v1487 = vadd.f32 0.0, %v1486
    %1488 = vdwg.mxu0
    %1489 = vmatpush.msra.mxu0 0.0
    %1490 = vmatpush.msra.mxu0 0.0
    %1491 = vmatpush.msra.mxu0 0.0
    %1492 = vmatpush.msra.mxu0 0.0
    %1493 = vmatpush.msra.mxu0 0.0
    %1494 = vmatpush.msra.mxu0 0.0
    %1495 = vmatpush.msra.mxu0 0.0
    %1496 = vmatpush.msra.mxu0 0.0
    %1497 = vmatpush.msra.mxu0 %v288
    %1498 = vmatpush.msra.mxu0 %v286
    %1499 = vmatpush.msra.mxu0 %v284
    %1500 = vmatpush.msra.mxu0 %v282
    %1501 = vmatpush.msra.mxu0 %v280
    %1502 = vmatpush.msra.mxu0 %v278
    %1503 = vmatpush.msra.mxu0 %v276
    %1504 = vmatpush.msra.mxu0 %v274
    %1505 = vmatmul.f32.gmra.mxu0 %v1467
    %v1506 = vpop.f32.mrf.mxu0
    %v1507 = vadd.f32 0.0, %v1506
    %1508 = vdwg.mxu0
    %v1511 = vrot.slane %v1487, 1
    %v1512 = vrot.slane %v1507, 1
    %v1513 = vrot.slane %v1487, 2
    %v1514 = vrot.slane %v1507, 2
    %v1519 = vadd.f32 %v245, %v1511
    %v1520 = vadd.f32 %v268, %v1512
    %v1521 = vadd.f32 %v248, %v1513
    %v1522 = vadd.f32 %v271, %v1514
    %v1523 = vxor.u32 %v1519, 2147483648
    %v1524 = vxor.u32 %v1521, 2147483648
    %v1525 = vmul.f32 %v1523, 1.442695
    %v1526 = vpow.pop %v1525
    %v1527 = vmul.f32 %v1524, 1.442695
    %v1528 = vpow.pop %v1527
    %v1529 = vadd.f32 %v1526, 1.0
    %v1530 = vadd.f32 %v1528, 1.0
    %v1531 = vrcp.pop %v1529
    %v1532 = vmul.f32 %v1529, %v1531
    %v1533 = vsub.f32 1.0, %v1532
    %v1534 = vmul.f32 %v1531, %v1533
    %v1535 = vadd.f32 %v1531, %v1534
    %vm1536 = vweird.f32 %v1529
    %vm1537 = vweird.f32 %v1531
    %vm1538 = vmor %vm1536, %vm1537
    %v1539 = vsel %vm1538, %v1531, %v1535
    %v1540 = vand.u32 2147483647, %v1529
    %vm1541 = vcmp.eq.f32.partialorder %v1540, 8.507059e+37
    %v1542 = vand.u32 %v1529, 2147483648
    %v1543 = vor.u32 1.1754944e-38, %v1542
    %v1544 = vsel %vm1541, %v1543, %v1539
    %v1545 = vmul.f32 1.0, %v1544
    %v1546 = vrcp.pop %v1530
    %v1547 = vmul.f32 %v1530, %v1546
    %v1548 = vsub.f32 1.0, %v1547
    %v1549 = vmul.f32 %v1546, %v1548
    %v1550 = vadd.f32 %v1546, %v1549
    %vm1551 = vweird.f32 %v1530
    %vm1552 = vweird.f32 %v1546
    %vm1553 = vmor %vm1551, %vm1552
    %v1554 = vsel %vm1553, %v1546, %v1550
    %v1555 = vand.u32 2147483647, %v1530
    %vm1556 = vcmp.eq.f32.partialorder %v1555, 8.507059e+37
    %v1557 = vand.u32 %v1530, 2147483648
    %v1558 = vor.u32 1.1754944e-38, %v1557
    %v1559 = vsel %vm1556, %v1558, %v1554
    %v1560 = vmul.f32 1.0, %v1559
    %v1561 = vtanh.pop %v1520
    %v1562 = vtanh.pop %v1522
    %v1563 = vxor.u32 %v1520, 2147483648
    %v1564 = vxor.u32 %v1522, 2147483648
    %v1565 = vmul.f32 %v1563, 1.442695
    %v1566 = vpow.pop %v1565
    %v1567 = vmul.f32 %v1564, 1.442695
    %v1568 = vpow.pop %v1567
    %v1569 = vadd.f32 %v1566, 1.0
    %v1570 = vadd.f32 %v1568, 1.0
    %v1571 = vrcp.pop %v1569
    %v1572 = vmul.f32 %v1569, %v1571
    %v1573 = vsub.f32 1.0, %v1572
    %v1574 = vmul.f32 %v1571, %v1573
    %v1575 = vadd.f32 %v1571, %v1574
    %vm1576 = vweird.f32 %v1569
    %vm1577 = vweird.f32 %v1571
    %vm1578 = vmor %vm1576, %vm1577
    %v1579 = vsel %vm1578, %v1571, %v1575
    %v1580 = vand.u32 2147483647, %v1569
    %vm1581 = vcmp.eq.f32.partialorder %v1580, 8.507059e+37
    %v1582 = vand.u32 %v1569, 2147483648
    %v1583 = vor.u32 1.1754944e-38, %v1582
    %v1584 = vsel %vm1581, %v1583, %v1579
    %v1585 = vmul.f32 1.0, %v1584
    %v1586 = vrcp.pop %v1570
    %v1587 = vmul.f32 %v1570, %v1586
    %v1588 = vsub.f32 1.0, %v1587
    %v1589 = vmul.f32 %v1586, %v1588
    %v1590 = vadd.f32 %v1586, %v1589
    %vm1591 = vweird.f32 %v1570
    %vm1592 = vweird.f32 %v1586
    %vm1593 = vmor %vm1591, %vm1592
    %v1594 = vsel %vm1593, %v1586, %v1590
    %v1595 = vand.u32 2147483647, %v1570
    %vm1596 = vcmp.eq.f32.partialorder %v1595, 8.507059e+37
    %v1597 = vand.u32 %v1570, 2147483648
    %v1598 = vor.u32 1.1754944e-38, %v1597
    %v1599 = vsel %vm1596, %v1598, %v1594
    %v1600 = vmul.f32 1.0, %v1599
    %v1603 = vrot.slane %v1449, 7
    %v1604 = vrot.slane %v1450, 7
    %v1607 = vmul.f32 %v1545, %v1603
    %v1608 = vmul.f32 %v1560, %v1604
    %v1609 = vmul.f32 %v1545, %v1561
    %v1610 = vmul.f32 %v1560, %v1562
    %1613 = vrot.lane.b32.xlu0 %v1609, 64
    %v1614 = vpop.permute.xlu0 %1613
    %1615 = vrot.lane.b32.xlu0 %v1610, 64
    %v1616 = vpop.permute.xlu0 %1615
    %v1619 = vadd.f32 %v1607, %v1614
    %v1620 = vadd.f32 %v1608, %v1616
    %v1621 = vtanh.pop %v1619
    %v1622 = vtanh.pop %v1620
    %v1623 = vmul.f32 %v1585, %v1621
    %v1624 = vmul.f32 %v1600, %v1622
    %v1627 = vrot.slane %v1623, 7
    %v1628 = vrot.slane %v1624, 7
    %v1631 = vadd.f32 %v1461, %v1627
    %v1632 = vadd.f32 %v1462, %v1628
    %v1633 = vmul.f32 %v1631, 0.125
    %v1634 = vmul.f32 %v1632, 0.125
    %v1635 = vld [vmem:[%s5] sm:$0xff]
    %v1636 = vld [vmem:[%s5 + $0x8] sm:$0xff]
    %v1637 = vld [vmem:[%s5 + $0x10] sm:$0xff]
    %v1638 = vld [vmem:[%s5 + $0x18] sm:$0xff]
    %v1639 = vld [vmem:[%s5 + $0x20] sm:$0xff]
    %v1640 = vld [vmem:[%s5 + $0x28] sm:$0xff]
    %v1641 = vld [vmem:[%s5 + $0x30] sm:$0xff]
    %v1642 = vld [vmem:[%s5 + $0x38] sm:$0xff]
    %v1643 = vld [vmem:[%s5 + $0x40] sm:$0xff]
    %v1644 = vld [vmem:[%s5 + $0x48] sm:$0xff]
    %v1645 = vld [vmem:[%s5 + $0x50] sm:$0xff]
    %v1646 = vld [vmem:[%s5 + $0x58] sm:$0xff]
    %v1647 = vld [vmem:[%s5 + $0x60] sm:$0xff]
    %v1648 = vld [vmem:[%s5 + $0x68] sm:$0xff]
    %v1649 = vld [vmem:[%s5 + $0x70] sm:$0xff]
    %v1650 = vld [vmem:[%s5 + $0x78] sm:$0xff]
    %v1651 = vld [vmem:[%s6] sm:$0x3]
    %v1653 = vperm.slane %v1651, 0
    %v1654 = vperm.slane %v1651, 1
    %v1659 = vrot.slane %v1634, 7
    %v1660 = vsel %vm446, %v1659, %v1633
    %1661 = vrot.lane.b32.xlu0 %v1660, 64
    %v1662 = vpop.permute.xlu0 %1661
    %v1663 = vsel %vm289, %v1662, 0
    %1665 = vmatpush.msra.mxu0 0.0
    %1666 = vmatpush.msra.mxu0 0.0
    %1667 = vmatpush.msra.mxu0 0.0
    %1668 = vmatpush.msra.mxu0 0.0
    %1669 = vmatpush.msra.mxu0 0.0
    %1670 = vmatpush.msra.mxu0 0.0
    %1671 = vmatpush.msra.mxu0 0.0
    %1672 = vmatpush.msra.mxu0 0.0
    %1673 = vmatpush.msra.mxu0 %v1649
    %1674 = vmatpush.msra.mxu0 %v1647
    %1675 = vmatpush.msra.mxu0 %v1645
    %1676 = vmatpush.msra.mxu0 %v1643
    %1677 = vmatpush.msra.mxu0 %v1641
    %1678 = vmatpush.msra.mxu0 %v1639
    %1679 = vmatpush.msra.mxu0 %v1637
    %1680 = vmatpush.msra.mxu0 %v1635
    %1681 = vmatmul.f32.gmra.mxu0 %v1663
    %v1682 = vpop.f32.mrf.mxu0
    %v1683 = vadd.f32 %v1653, %v1682
    %1684 = vdwg.mxu0
    %1685 = vmatpush.msra.mxu0 0.0
    %1686 = vmatpush.msra.mxu0 0.0
    %1687 = vmatpush.msra.mxu0 0.0
    %1688 = vmatpush.msra.mxu0 0.0
    %1689 = vmatpush.msra.mxu0 0.0
    %1690 = vmatpush.msra.mxu0 0.0
    %1691 = vmatpush.msra.mxu0 0.0
    %1692 = vmatpush.msra.mxu0 0.0
    %1693 = vmatpush.msra.mxu0 %v1650
    %1694 = vmatpush.msra.mxu0 %v1648
    %1695 = vmatpush.msra.mxu0 %v1646
    %1696 = vmatpush.msra.mxu0 %v1644
    %1697 = vmatpush.msra.mxu0 %v1642
    %1698 = vmatpush.msra.mxu0 %v1640
    %1699 = vmatpush.msra.mxu0 %v1638
    %1700 = vmatpush.msra.mxu0 %v1636
    %1701 = vmatmul.f32.gmra.mxu0 %v1663
    %v1702 = vpop.f32.mrf.mxu0
    %v1703 = vadd.f32 %v1654, %v1702
    %1704 = vdwg.mxu0
    %v1707 = vrot.slane %v1703, 6
    %vm1708 = vcmask 1041408
    %v1709 = vsel %vm1708, %v1683, %v1707
    %1711 = vst [vmem:[#allocation2] sm:$0xf] %v1709
    // Predicated region
    $region30: #{model_forward.1} parent=1 // pred_check
      _
    $region31: #{model_forward.1} parent=1 // pred_check_branch
      %1713 = sbr.rel (0) target = $region33
    $region32: #{model_forward.1} parent=1 // pred_region
      %1715 = vsyncadd [#allocation3], 0
      %s1717 = sshll.u32 [#allocation2], 4
      %s1718 = int_to_ptr.vmem [resolvable:$true] %s1717
      %s1719 = sshll.u32 %s7, 4
      %s1720 = int_to_ptr.hbm [resolvable:$true] %s1719
      %1722 = dma.vmem_to_hbm [thread:$0]  %s1718, 64, %s1720, [#allocation3]
    $region33: #{model_forward.1} parent=1 // pred_fallthru
      _
    // Predicated region
    $region34: #{model_forward.1} parent=1 // pred_check
      _
    $region35: #{model_forward.1} parent=1 // pred_check_branch
      %1724 = sbr.rel (0) target = $region37
    $region36: #{model_forward.1} parent=1 // pred_region
      %1726 = dma.done [#allocation3], 64
    $region37: #{model_forward.1} parent=1 // pred_fallthru
      _
    %1727 = vsyncpa [#allocation3], 1

</llo_original>
